<compile_context>
chip_gen: v7x
topology: tpu7x:2x2x1
jax: 0.10.0
libtpu: 0.0.40
codegen_flags: <defaults>
</compile_context>

<pallas_src>
import jax
import jax.numpy as jnp
from jax import lax
from jax.experimental import pallas as pl
from jax.experimental.pallas import tpu as pltpu

LANES = 128
_COMPUTE_DTYPE = jnp.bfloat16


def _round_up(x, m):
    return (x + m - 1) // m * m


def _pick_tile(m, cap):
    """Row-tile size: `cap` rows (multiple of 32) or the whole (rounded) extent."""
    return cap if m >= cap else _round_up(m, 32)


def _pad2d(a, rows, cols):
    return jnp.pad(a, ((0, rows - a.shape[0]), (0, cols - a.shape[1])))


# ----------------------------- Pallas kernels ------------------------------

def _conv_relu_pool_kernel(p_ref, w_ref, b_ref, o_ref):
    """Fused conv (im2col matmul) + 2x2/stride-2 max-pool + bias + ReLU.

    p_ref : (4*TM, Kp)  patches for one tile of TM pooled pixels; rows
            [k*TM, (k+1)*TM) hold pooling offset k.          (bf16)
    w_ref : (Kp, 128)   conv weight, channel dim padded to 128 lanes. (bf16)
    b_ref : (1, 128)    bias, channel-padded.                 (f32)
    o_ref : (TM, 128)   pooled/ReLU'd conv output.            (bf16)
    """
    tm = o_ref.shape[0]
    # Single MXU push for all four pooling offsets.
    y = jnp.dot(p_ref[...], w_ref[...], preferred_element_type=jnp.float32)
    # Max over the four offsets (static, tile-aligned sublane slices), then bias+ReLU once.
    m = jnp.maximum(jnp.maximum(y[0 * tm:1 * tm], y[1 * tm:2 * tm]),
                    jnp.maximum(y[2 * tm:3 * tm], y[3 * tm:4 * tm]))
    o_ref[...] = jnp.maximum(m + b_ref[...], 0.0).astype(o_ref.dtype)


def _mlp_kernel(x_ref, w1_ref, b1_ref, w2_ref, b2_ref, w3_ref, b3_ref, o_ref):
    """fc3(relu(fc2(relu(fc1(x))))) fused; every width lane-padded to 128."""
    h = jnp.dot(x_ref[...], w1_ref[...], preferred_element_type=jnp.float32) + b1_ref[...]
    h = jnp.maximum(h, 0.0).astype(w2_ref.dtype)
    h = jnp.dot(h, w2_ref[...], preferred_element_type=jnp.float32) + b2_ref[...]
    h = jnp.maximum(h, 0.0).astype(w3_ref.dtype)
    o_ref[...] = jnp.dot(h, w3_ref[...], preferred_element_type=jnp.float32) + b3_ref[...]


# ------------------------------ host wrappers -------------------------------

_PARALLEL = pltpu.CompilerParams(dimension_semantics=("parallel",))


def conv_relu_pool(x_nhwc, w, b, *, block_m=256):
    """F.max_pool2d(F.relu(conv2d(x, w, b)), 2) with channel-last activations.

    x_nhwc : (N, H, W, Cin)     w : (Cout, Cin, K, K) (PyTorch layout)     b : (Cout,)
    returns (N, Hp, Wp, Cout)
    """
    N, H, W, Cin = x_nhwc.shape
    Cout, _, K, _ = w.shape
    assert Cout <= LANES
    Ho, Wo = H - K + 1, W - K + 1
    assert Ho % 2 == 0 and Wo % 2 == 0, "pooling expects even conv output here"
    Hp, Wp = Ho // 2, Wo // 2
    Kd = Cin * K * K
    Kp = _round_up(Kd, LANES)
    M = N * Hp * Wp
    TM = _pick_tile(M, block_m)
    Mp = _round_up(M, TM)
    n_t = Mp // TM

    # im2col in one XLA op; feature order is (cin, kh, kw) == torch w.reshape(Cout,-1) order.
    patches = lax.conv_general_dilated_patches(
        x_nhwc.astype(_COMPUTE_DTYPE), (K, K), (1, 1), 'VALID',
        dimension_numbers=('NHWC', 'HWIO', 'NHWC'))            # (N, Ho, Wo, Kd)

    # The four 2x2-pool offsets, stacked offset-major then regrouped so each grid
    # tile sees a contiguous (4*TM, Kp) slab: one DMA + one matmul per tile.
    p = jnp.stack([patches[:, 0::2, 0::2, :], patches[:, 0::2, 1::2, :],
                   patches[:, 1::2, 0::2, :], patches[:, 1::2, 1::2, :]],
                  axis=0).reshape(4, M, Kd)
    p = jnp.pad(p, ((0, 0), (0, Mp - M), (0, Kp - Kd)))
    p = p.reshape(4, n_t, TM, Kp).transpose(1, 0, 2, 3).reshape(n_t * 4 * TM, Kp)

    wmat = _pad2d(w.reshape(Cout, Kd).T, Kp, LANES).astype(_COMPUTE_DTYPE)   # (Kp, 128)
    bmat = _pad2d(b.reshape(1, Cout), 1, LANES).astype(jnp.float32)          # (1, 128)

    cost = pl.CostEstimate(
        flops=2 * 4 * Mp * Kp * LANES,
        transcendentals=0,
        bytes_accessed=(4 * Mp * Kp + Kp * LANES + Mp * LANES) * 2 + LANES * 4)

    out = pl.pallas_call(
        _conv_relu_pool_kernel,
        grid=(n_t,),
        in_specs=[pl.BlockSpec((4 * TM, Kp), lambda i: (i, 0)),
                  pl.BlockSpec((Kp, LANES), lambda i: (0, 0)),   # weight: VMEM-resident
                  pl.BlockSpec((1, LANES), lambda i: (0, 0))],   # bias:   VMEM-resident
        out_specs=pl.BlockSpec((TM, LANES), lambda i: (i, 0)),
        out_shape=jax.ShapeDtypeStruct((Mp, LANES), _COMPUTE_DTYPE),
        compiler_params=_PARALLEL,
        cost_estimate=cost,
    )(p, wmat, bmat)

    # rows are (n, i, j); keep channel-last, drop row and lane padding.
    return out[:M].reshape(N, Hp, Wp, LANES)[..., :Cout]


def mlp(x, w1, b1, w2, b2, w3, b3, *, block_m=256):
    """fc3(relu(fc2(relu(fc1(x))))); x: (N, Kin) -> (N, out)."""
    N, Kin = x.shape
    H1, H2, H3 = w1.shape[0], w2.shape[0], w3.shape[0]
    assert max(H1, H2, H3) <= LANES
    Kp = _round_up(Kin, LANES)
    TM = _pick_tile(N, block_m)
    Np = _round_up(N, TM)

    xp = _pad2d(x, Np, Kp).astype(_COMPUTE_DTYPE)
    w1m = _pad2d(w1.T, Kp, LANES).astype(_COMPUTE_DTYPE)        # (Kp, 128)
    w2m = _pad2d(w2.T, LANES, LANES).astype(_COMPUTE_DTYPE)     # (128, 128)
    w3m = _pad2d(w3.T, LANES, LANES).astype(_COMPUTE_DTYPE)     # (128, 128)
    b1m = _pad2d(b1.reshape(1, -1), 1, LANES).astype(jnp.float32)
    b2m = _pad2d(b2.reshape(1, -1), 1, LANES).astype(jnp.float32)
    b3m = _pad2d(b3.reshape(1, -1), 1, LANES).astype(jnp.float32)

    cost = pl.CostEstimate(
        flops=2 * Np * (Kp + 2 * LANES) * LANES,
        transcendentals=0,
        bytes_accessed=(Np * Kp + Kp * LANES + 2 * LANES * LANES) * 2 + Np * LANES * 4)

    const = lambda i: (0, 0)
    out = pl.pallas_call(
        _mlp_kernel,
        grid=(Np // TM,),
        in_specs=[pl.BlockSpec((TM, Kp), lambda i: (i, 0)),
                  pl.BlockSpec((Kp, LANES), const), pl.BlockSpec((1, LANES), const),
                  pl.BlockSpec((LANES, LANES), const), pl.BlockSpec((1, LANES), const),
                  pl.BlockSpec((LANES, LANES), const), pl.BlockSpec((1, LANES), const)],
        out_specs=pl.BlockSpec((TM, LANES), lambda i: (i, 0)),
        out_shape=jax.ShapeDtypeStruct((Np, LANES), jnp.float32),
        compiler_params=_PARALLEL,
        cost_estimate=cost,
    )(xp, w1m, b1m, w2m, b2m, w3m, b3m)

    return out[:N, :H3]


def net_forward(x, params):
    """x: (N, 3, 32, 32) NCHW float32, exactly like the PyTorch module."""
    x = jnp.transpose(x, (0, 2, 3, 1))                                    # NHWC once
    a = conv_relu_pool(x, params["conv1_w"], params["conv1_b"])           # (N, 14, 14, 6)
    a = conv_relu_pool(a, params["conv2_w"], params["conv2_b"])           # (N, 5, 5, 16)
    N, Hp, Wp, C = a.shape
    flat = a.reshape(N, Hp * Wp * C)                                      # (h, w, c) flatten
    # torch fc1 columns are (c, h, w); reorder the (tiny) weight once instead of
    # transposing the activation back to NCHW.
    w1 = params["fc1_w"].reshape(-1, C, Hp, Wp).transpose(0, 2, 3, 1).reshape(-1, Hp * Wp * C)
    return mlp(flat, w1, params["fc1_b"],
               params["fc2_w"], params["fc2_b"],
               params["fc3_w"], params["fc3_b"])                          # (N, 10) float32


# ------------------------------ param init ---------------------------------

def init_params(key):
    ks = jax.random.split(key, 10)

    def u(k, shape, fan_in):
        bound = 1.0 / jnp.sqrt(jnp.float32(fan_in))
        return jax.random.uniform(k, shape, jnp.float32, -bound, bound)

    return {
        "conv1_w": u(ks[0], (6, 3, 5, 5), 3 * 25),
        "conv1_b": u(ks[1], (6,), 3 * 25),
        "conv2_w": u(ks[2], (16, 6, 5, 5), 6 * 25),
        "conv2_b": u(ks[3], (16,), 6 * 25),
        "fc1_w": u(ks[4], (120, 400), 400),
        "fc1_b": u(ks[5], (120,), 400),
        "fc2_w": u(ks[6], (84, 120), 120),
        "fc2_b": u(ks[7], (84,), 120),
        "fc3_w": u(ks[8], (10, 84), 84),
        "fc3_b": u(ks[9], (10,), 84),
    }


if __name__ == "__main__":
    key = jax.random.PRNGKey(0)
    pkey, xkey = jax.random.split(key)
    params = init_params(pkey)
    x = jax.random.normal(xkey, (2, 3, 32, 32), jnp.float32)   # NCHW, like PyTorch

    out = jax.jit(net_forward)(x, params)
    out = jax.block_until_ready(out)
    assert out.shape == (2, 10) and out.dtype == jnp.float32
    print("KERNEL_OK")
</pallas_src>

<mosaic_0001>
module attributes {stable_mosaic.version = 11 : i64} {
  func.func @_conv_relu_pool_kernel(%arg0: i32, %arg1: memref<1024x128xbf16, #tpu.memory_space<vmem>>, %arg2: memref<128x128xbf16, #tpu.memory_space<vmem>>, %arg3: memref<1x128xf32, #tpu.memory_space<vmem>>, %arg4: memref<256x128xbf16, #tpu.memory_space<vmem>>) attributes {dimension_semantics = [#tpu.dimension_semantics<parallel>], iteration_bounds = array<i64: 2>, scalar_prefetch = 0 : i64, scratch_operands = 0 : i64, tpu.core_type = #tpu.core_type<tc>, window_params = [{transform_indices = @transform_0, window_bounds = array<i64: 1024, 128>}, {pipeline_mode = #tpu.pipeline_mode<synchronous>, transform_indices = @transform_1, window_bounds = array<i64: 128, 128>}, {pipeline_mode = #tpu.pipeline_mode<synchronous>, transform_indices = @transform_2, window_bounds = array<i64: 1, 128>}, {transform_indices = @transform_3, window_bounds = array<i64: 256, 128>}]} {
    %c0 = arith.constant 0 : index
    %c0_0 = arith.constant 0 : index
    %0 = vector.load %arg1[%c0, %c0_0] : memref<1024x128xbf16, #tpu.memory_space<vmem>>, vector<1024x128xbf16>
    %c0_1 = arith.constant 0 : index
    %c0_2 = arith.constant 0 : index
    %1 = vector.load %arg2[%c0_1, %c0_2] : memref<128x128xbf16, #tpu.memory_space<vmem>>, vector<128x128xbf16>
    %cst = arith.constant dense<0.000000e+00> : vector<1024x128xf32>
    %2 = tpu.matmul %0, %1, %cst {dimension_numbers = #tpu.dot_dimension_numbers<[1], [0], [0], [1], [0, 0, 1, 1], [], []>} : vector<1024x128xbf16>, vector<128x128xbf16>, vector<1024x128xf32> -> vector<1024x128xf32>
    %3 = vector.extract_strided_slice %2 {offsets = [0, 0], sizes = [256, 128], strides = [1, 1]} : vector<1024x128xf32> to vector<256x128xf32>
    %4 = vector.extract_strided_slice %2 {offsets = [256, 0], sizes = [256, 128], strides = [1, 1]} : vector<1024x128xf32> to vector<256x128xf32>
    %5 = arith.maximumf %3, %4 : vector<256x128xf32>
    %6 = vector.extract_strided_slice %2 {offsets = [512, 0], sizes = [256, 128], strides = [1, 1]} : vector<1024x128xf32> to vector<256x128xf32>
    %7 = vector.extract_strided_slice %2 {offsets = [768, 0], sizes = [256, 128], strides = [1, 1]} : vector<1024x128xf32> to vector<256x128xf32>
    %8 = arith.maximumf %6, %7 : vector<256x128xf32>
    %9 = arith.maximumf %5, %8 : vector<256x128xf32>
    %c0_3 = arith.constant 0 : index
    %c0_4 = arith.constant 0 : index
    %10 = vector.load %arg3[%c0_3, %c0_4] : memref<1x128xf32, #tpu.memory_space<vmem>>, vector<1x128xf32>
    %11 = vector.broadcast %10 : vector<1x128xf32> to vector<256x128xf32>
    %12 = arith.addf %9, %11 : vector<256x128xf32>
    %cst_5 = arith.constant 0.000000e+00 : f32
    %13 = vector.broadcast %cst_5 : f32 to vector<256x128xf32>
    %14 = arith.maximumf %12, %13 : vector<256x128xf32>
    %15 = arith.truncf %14 : vector<256x128xf32> to vector<256x128xbf16>
    %c0_6 = arith.constant 0 : index
    %c0_7 = arith.constant 0 : index
    %16 = vector.load %arg4[%c0_6, %c0_7] : memref<256x128xbf16, #tpu.memory_space<vmem>>, vector<256x128xbf16>
    tpu.vector_store %arg4[%c0_6, %c0_7], %15 {strides = array<i32>} : memref<256x128xbf16, #tpu.memory_space<vmem>>, vector<256x128xbf16>,
    return
  }
  func.func @transform_0(%arg0: i32) -> (i32, i32) {
    %c0_i32 = arith.constant 0 : i32
    %c0_i32_0 = arith.constant 0 : i32
    return %arg0, %c0_i32 : i32, i32
  }
  func.func @transform_1(%arg0: i32) -> (i32, i32) {
    %c0_i32 = arith.constant 0 : i32
    %c0_i32_0 = arith.constant 0 : i32
    %c0_i32_1 = arith.constant 0 : i32
    return %c0_i32, %c0_i32_0 : i32, i32
  }
  func.func @transform_2(%arg0: i32) -> (i32, i32) {
    %c0_i32 = arith.constant 0 : i32
    %c0_i32_0 = arith.constant 0 : i32
    %c0_i32_1 = arith.constant 0 : i32
    return %c0_i32, %c0_i32_0 : i32, i32
  }
  func.func @transform_3(%arg0: i32) -> (i32, i32) {
    %c0_i32 = arith.constant 0 : i32
    %c0_i32_0 = arith.constant 0 : i32
    return %arg0, %c0_i32 : i32, i32
  }
}

module attributes {stable_mosaic.version = 11 : i64} {
  func.func @_conv_relu_pool_kernel(%arg0: i32, %arg1: memref<256x256xbf16, #tpu.memory_space<vmem>>, %arg2: memref<256x128xbf16, #tpu.memory_space<vmem>>, %arg3: memref<1x128xf32, #tpu.memory_space<vmem>>, %arg4: memref<64x128xbf16, #tpu.memory_space<vmem>>) attributes {dimension_semantics = [#tpu.dimension_semantics<parallel>], iteration_bounds = array<i64: 1>, scalar_prefetch = 0 : i64, scratch_operands = 0 : i64, tpu.core_type = #tpu.core_type<tc>, window_params = [{transform_indices = @transform_0, window_bounds = array<i64: 256, 256>}, {pipeline_mode = #tpu.pipeline_mode<synchronous>, transform_indices = @transform_1, window_bounds = array<i64: 256, 128>}, {pipeline_mode = #tpu.pipeline_mode<synchronous>, transform_indices = @transform_2, window_bounds = array<i64: 1, 128>}, {transform_indices = @transform_3, window_bounds = array<i64: 64, 128>}]} {
    %c0 = arith.constant 0 : index
    %c0_0 = arith.constant 0 : index
    %0 = vector.load %arg1[%c0, %c0_0] : memref<256x256xbf16, #tpu.memory_space<vmem>>, vector<256x256xbf16>
    %c0_1 = arith.constant 0 : index
    %c0_2 = arith.constant 0 : index
    %1 = vector.load %arg2[%c0_1, %c0_2] : memref<256x128xbf16, #tpu.memory_space<vmem>>, vector<256x128xbf16>
    %cst = arith.constant dense<0.000000e+00> : vector<256x128xf32>
    %2 = tpu.matmul %0, %1, %cst {dimension_numbers = #tpu.dot_dimension_numbers<[1], [0], [0], [1], [0, 0, 1, 1], [], []>} : vector<256x256xbf16>, vector<256x128xbf16>, vector<256x128xf32> -> vector<256x128xf32>
    %3 = vector.extract_strided_slice %2 {offsets = [0, 0], sizes = [64, 128], strides = [1, 1]} : vector<256x128xf32> to vector<64x128xf32>
    %4 = vector.extract_strided_slice %2 {offsets = [64, 0], sizes = [64, 128], strides = [1, 1]} : vector<256x128xf32> to vector<64x128xf32>
    %5 = arith.maximumf %3, %4 : vector<64x128xf32>
    %6 = vector.extract_strided_slice %2 {offsets = [128, 0], sizes = [64, 128], strides = [1, 1]} : vector<256x128xf32> to vector<64x128xf32>
    %7 = vector.extract_strided_slice %2 {offsets = [192, 0], sizes = [64, 128], strides = [1, 1]} : vector<256x128xf32> to vector<64x128xf32>
    %8 = arith.maximumf %6, %7 : vector<64x128xf32>
    %9 = arith.maximumf %5, %8 : vector<64x128xf32>
    %c0_3 = arith.constant 0 : index
    %c0_4 = arith.constant 0 : index
    %10 = vector.load %arg3[%c0_3, %c0_4] : memref<1x128xf32, #tpu.memory_space<vmem>>, vector<1x128xf32>
    %11 = vector.broadcast %10 : vector<1x128xf32> to vector<64x128xf32>
    %12 = arith.addf %9, %11 : vector<64x128xf32>
    %cst_5 = arith.constant 0.000000e+00 : f32
    %13 = vector.broadcast %cst_5 : f32 to vector<64x128xf32>
    %14 = arith.maximumf %12, %13 : vector<64x128xf32>
    %15 = arith.truncf %14 : vector<64x128xf32> to vector<64x128xbf16>
    %c0_6 = arith.constant 0 : index
    %c0_7 = arith.constant 0 : index
    %16 = vector.load %arg4[%c0_6, %c0_7] : memref<64x128xbf16, #tpu.memory_space<vmem>>, vector<64x128xbf16>
    tpu.vector_store %arg4[%c0_6, %c0_7], %15 {strides = array<i32>} : memref<64x128xbf16, #tpu.memory_space<vmem>>, vector<64x128xbf16>,
    return
  }
  func.func @transform_0(%arg0: i32) -> (i32, i32) {
    %c0_i32 = arith.constant 0 : i32
    %c0_i32_0 = arith.constant 0 : i32
    return %arg0, %c0_i32 : i32, i32
  }
  func.func @transform_1(%arg0: i32) -> (i32, i32) {
    %c0_i32 = arith.constant 0 : i32
    %c0_i32_0 = arith.constant 0 : i32
    %c0_i32_1 = arith.constant 0 : i32
    return %c0_i32, %c0_i32_0 : i32, i32
  }
  func.func @transform_2(%arg0: i32) -> (i32, i32) {
    %c0_i32 = arith.constant 0 : i32
    %c0_i32_0 = arith.constant 0 : i32
    %c0_i32_1 = arith.constant 0 : i32
    return %c0_i32, %c0_i32_0 : i32, i32
  }
  func.func @transform_3(%arg0: i32) -> (i32, i32) {
    %c0_i32 = arith.constant 0 : i32
    %c0_i32_0 = arith.constant 0 : i32
    return %arg0, %c0_i32 : i32, i32
  }
}

module attributes {stable_mosaic.version = 11 : i64} {
  func.func @_mlp_kernel(%arg0: i32, %arg1: memref<32x512xbf16, #tpu.memory_space<vmem>>, %arg2: memref<512x128xbf16, #tpu.memory_space<vmem>>, %arg3: memref<1x128xf32, #tpu.memory_space<vmem>>, %arg4: memref<128x128xbf16, #tpu.memory_space<vmem>>, %arg5: memref<1x128xf32, #tpu.memory_space<vmem>>, %arg6: memref<128x128xbf16, #tpu.memory_space<vmem>>, %arg7: memref<1x128xf32, #tpu.memory_space<vmem>>, %arg8: memref<32x128xf32, #tpu.memory_space<vmem>>) attributes {dimension_semantics = [#tpu.dimension_semantics<parallel>], iteration_bounds = array<i64: 1>, scalar_prefetch = 0 : i64, scratch_operands = 0 : i64, tpu.core_type = #tpu.core_type<tc>, window_params = [{transform_indices = @transform_0, window_bounds = array<i64: 32, 512>}, {pipeline_mode = #tpu.pipeline_mode<synchronous>, transform_indices = @transform_1, window_bounds = array<i64: 512, 128>}, {pipeline_mode = #tpu.pipeline_mode<synchronous>, transform_indices = @transform_2, window_bounds = array<i64: 1, 128>}, {pipeline_mode = #tpu.pipeline_mode<synchronous>, transform_indices = @transform_3, window_bounds = array<i64: 128, 128>}, {pipeline_mode = #tpu.pipeline_mode<synchronous>, transform_indices = @transform_4, window_bounds = array<i64: 1, 128>}, {pipeline_mode = #tpu.pipeline_mode<synchronous>, transform_indices = @transform_5, window_bounds = array<i64: 128, 128>}, {pipeline_mode = #tpu.pipeline_mode<synchronous>, transform_indices = @transform_6, window_bounds = array<i64: 1, 128>}, {transform_indices = @transform_7, window_bounds = array<i64: 32, 128>}]} {
    %c0 = arith.constant 0 : index
    %c0_0 = arith.constant 0 : index
    %0 = vector.load %arg1[%c0, %c0_0] : memref<32x512xbf16, #tpu.memory_space<vmem>>, vector<32x512xbf16>
    %c0_1 = arith.constant 0 : index
    %c0_2 = arith.constant 0 : index
    %1 = vector.load %arg2[%c0_1, %c0_2] : memref<512x128xbf16, #tpu.memory_space<vmem>>, vector<512x128xbf16>
    %cst = arith.constant dense<0.000000e+00> : vector<32x128xf32>
    %2 = tpu.matmul %0, %1, %cst {dimension_numbers = #tpu.dot_dimension_numbers<[1], [0], [0], [1], [0, 0, 1, 1], [], []>} : vector<32x512xbf16>, vector<512x128xbf16>, vector<32x128xf32> -> vector<32x128xf32>
    %c0_3 = arith.constant 0 : index
    %c0_4 = arith.constant 0 : index
    %3 = vector.load %arg3[%c0_3, %c0_4] : memref<1x128xf32, #tpu.memory_space<vmem>>, vector<1x128xf32>
    %4 = vector.broadcast %3 : vector<1x128xf32> to vector<32x128xf32>
    %5 = arith.addf %2, %4 : vector<32x128xf32>
    %cst_5 = arith.constant 0.000000e+00 : f32
    %6 = vector.broadcast %cst_5 : f32 to vector<32x128xf32>
    %7 = arith.maximumf %5, %6 : vector<32x128xf32>
    %8 = arith.truncf %7 : vector<32x128xf32> to vector<32x128xbf16>
    %c0_6 = arith.constant 0 : index
    %c0_7 = arith.constant 0 : index
    %9 = vector.load %arg4[%c0_6, %c0_7] : memref<128x128xbf16, #tpu.memory_space<vmem>>, vector<128x128xbf16>
    %cst_8 = arith.constant dense<0.000000e+00> : vector<32x128xf32>
    %10 = tpu.matmul %8, %9, %cst_8 {dimension_numbers = #tpu.dot_dimension_numbers<[1], [0], [0], [1], [0, 0, 1, 1], [], []>} : vector<32x128xbf16>, vector<128x128xbf16>, vector<32x128xf32> -> vector<32x128xf32>
    %c0_9 = arith.constant 0 : index
    %c0_10 = arith.constant 0 : index
    %11 = vector.load %arg5[%c0_9, %c0_10] : memref<1x128xf32, #tpu.memory_space<vmem>>, vector<1x128xf32>
    %12 = vector.broadcast %11 : vector<1x128xf32> to vector<32x128xf32>
    %13 = arith.addf %10, %12 : vector<32x128xf32>
    %cst_11 = arith.constant 0.000000e+00 : f32
    %14 = vector.broadcast %cst_11 : f32 to vector<32x128xf32>
    %15 = arith.maximumf %13, %14 : vector<32x128xf32>
    %16 = arith.truncf %15 : vector<32x128xf32> to vector<32x128xbf16>
    %c0_12 = arith.constant 0 : index
    %c0_13 = arith.constant 0 : index
    %17 = vector.load %arg6[%c0_12, %c0_13] : memref<128x128xbf16, #tpu.memory_space<vmem>>, vector<128x128xbf16>
    %cst_14 = arith.constant dense<0.000000e+00> : vector<32x128xf32>
    %18 = tpu.matmul %16, %17, %cst_14 {dimension_numbers = #tpu.dot_dimension_numbers<[1], [0], [0], [1], [0, 0, 1, 1], [], []>} : vector<32x128xbf16>, vector<128x128xbf16>, vector<32x128xf32> -> vector<32x128xf32>
    %c0_15 = arith.constant 0 : index
    %c0_16 = arith.constant 0 : index
    %19 = vector.load %arg7[%c0_15, %c0_16] : memref<1x128xf32, #tpu.memory_space<vmem>>, vector<1x128xf32>
    %20 = vector.broadcast %19 : vector<1x128xf32> to vector<32x128xf32>
    %21 = arith.addf %18, %20 : vector<32x128xf32>
    %c0_17 = arith.constant 0 : index
    %c0_18 = arith.constant 0 : index
    %22 = vector.load %arg8[%c0_17, %c0_18] : memref<32x128xf32, #tpu.memory_space<vmem>>, vector<32x128xf32>
    tpu.vector_store %arg8[%c0_17, %c0_18], %21 {strides = array<i32>} : memref<32x128xf32, #tpu.memory_space<vmem>>, vector<32x128xf32>,
    return
  }
  func.func @transform_0(%arg0: i32) -> (i32, i32) {
    %c0_i32 = arith.constant 0 : i32
    %c0_i32_0 = arith.constant 0 : i32
    return %arg0, %c0_i32 : i32, i32
  }
  func.func @transform_1(%arg0: i32) -> (i32, i32) {
    %c0_i32 = arith.constant 0 : i32
    %c0_i32_0 = arith.constant 0 : i32
    %c0_i32_1 = arith.constant 0 : i32
    return %c0_i32, %c0_i32_0 : i32, i32
  }
  func.func @transform_2(%arg0: i32) -> (i32, i32) {
    %c0_i32 = arith.constant 0 : i32
    %c0_i32_0 = arith.constant 0 : i32
    %c0_i32_1 = arith.constant 0 : i32
    return %c0_i32, %c0_i32_0 : i32, i32
  }
  func.func @transform_3(%arg0: i32) -> (i32, i32) {
    %c0_i32 = arith.constant 0 : i32
    %c0_i32_0 = arith.constant 0 : i32
    %c0_i32_1 = arith.constant 0 : i32
    return %c0_i32, %c0_i32_0 : i32, i32
  }
  func.func @transform_4(%arg0: i32) -> (i32, i32) {
    %c0_i32 = arith.constant 0 : i32
    %c0_i32_0 = arith.constant 0 : i32
    %c0_i32_1 = arith.constant 0 : i32
    return %c0_i32, %c0_i32_0 : i32, i32
  }
  func.func @transform_5(%arg0: i32) -> (i32, i32) {
    %c0_i32 = arith.constant 0 : i32
    %c0_i32_0 = arith.constant 0 : i32
    %c0_i32_1 = arith.constant 0 : i32
    return %c0_i32, %c0_i32_0 : i32, i32
  }
  func.func @transform_6(%arg0: i32) -> (i32, i32) {
    %c0_i32 = arith.constant 0 : i32
    %c0_i32_0 = arith.constant 0 : i32
    %c0_i32_1 = arith.constant 0 : i32
    return %c0_i32, %c0_i32_0 : i32, i32
  }
  func.func @transform_7(%arg0: i32) -> (i32, i32) {
    %c0_i32 = arith.constant 0 : i32
    %c0_i32_0 = arith.constant 0 : i32
    return %arg0, %c0_i32 : i32, i32
  }
}

</mosaic_0001>

<llo_original>
// kernel: net_forward.3
$region0: #{net_forward.3}
  #allocation0 [shape = 'u32[]', space=smem, size = 0x4, offset = 0x4, fixed_abs, tag = 'smem constant byte address 0x4 - core index']
  #allocation1 [shape = 'u32[144,128]{1,0:T(1,128)}', space=vmem, size = 0x12000, scoped, tag = 'internal scratch']
  %s0 = inlined_call_operand.vmem [shape: bf16[2048,128], index: 0, kind: input, shape index: {}]
  %s1 = inlined_call_operand.vmem [shape: bf16[128,128], index: 1, kind: input, shape index: {}]
  %s2 = inlined_call_operand.vmem [shape: f32[1,128], index: 2, kind: input, shape index: {}]
  %s3 = inlined_call_operand.vmem [shape: bf16[512,128], index: 3, kind: output, shape index: {}]
  %s4 = sld [smem:[#allocation0]]
  $region45: #{net_forward.3} parent=0
    _
  %s6 = ssub.s32 1, %s4
  %s7 = scalar_select 0, %s6, %s4
  loop: start=0, step=1, limit=4
  $region2: #{net_forward.3} parent=0 // loop_pre_header
    _
  $region3: #{net_forward.3} parent=0 // loop_header
    %s9 = sphi 0, %s13
    %p10 = scmp.ge.s32.totalorder %s9, 4
    %s19 = sphi 0, %s21
    %s22 = sphi 0, %s19
    %s23 = sphi 0, %s22
    %s39 = sphi 0, %s23
    %s43 = sphi 0, %s43
    %s45 = sphi 0, %s43
    %s46 = sphi 0, %s45
    %s60 = sphi 0, %s46
    %s64 = sphi 0, %s64
    %s66 = sphi 0, %s64
    %s67 = sphi 0, %s66
    %s81 = sphi 0, %s67
    %s87 = sphi 0, %s89
    %s90 = sphi 0, %s87
    %s91 = sphi 0, %s90
    %s107 = sphi 0, %s91
  $region4: #{net_forward.3} parent=0 // loop_header_branch
    %12 = sbr.rel (%p10) target = $region8
  $region5: #{net_forward.3} parent=0 // loop_body
    %s14 = ssub.s32 %s9, 1
    %s15 = ssub.s32 %s9, 2
    %s16 = sadd.s32 %s9, 1
    %s17 = ssub.s32 %s9, %s16
    %p18 = scmp.eq.s32.totalorder %s17, 0
    %s20 = sadd.s32 %s19, 1
    %s21 = scalar_select %p18, %s19, %s20
    %p24 = pneg %p18
    %p25 = scmp.eq.s32.totalorder %s9, 1
    %p26 = por %p24, %p25
    %p27 = scmp.ne.s32.totalorder %s19, %s22
    %p28 = scmp.eq.s32.totalorder %s9, 0
    %p29 = por %p27, %p28
    %p30 = scmp.ne.s32.totalorder %s19, %s22
    %p31 = scmp.eq.s32.totalorder %s14, 1
    %p32 = por %p30, %p31
    %p33 = scmp.ne.s32.totalorder %s22, %s23
    %p34 = scmp.eq.s32.totalorder %s14, 0
    %p35 = por %p33, %p34
    %p36 = scmp.ne.s32.totalorder %s22, %s23
    %p37 = scmp.eq.s32.totalorder %s15, 1
    %p38 = por %p36, %p37
    %p40 = scmp.ne.s32.totalorder %s23, %s39
    %p41 = scmp.eq.s32.totalorder %s15, 0
    %p42 = por %p40, %p41
    %s44 = sadd.s32 %s43, 1
    %p47 = scmp.eq.s32.totalorder %s9, 1
    %p48 = scmp.ne.s32.totalorder %s43, %s45
    %p49 = scmp.eq.s32.totalorder %s9, 0
    %p50 = por %p48, %p49
    %p51 = scmp.ne.s32.totalorder %s43, %s45
    %p52 = scmp.eq.s32.totalorder %s14, 1
    %p53 = por %p51, %p52
    %p54 = scmp.ne.s32.totalorder %s45, %s46
    %p55 = scmp.eq.s32.totalorder %s14, 0
    %p56 = por %p54, %p55
    %p57 = scmp.ne.s32.totalorder %s45, %s46
    %p58 = scmp.eq.s32.totalorder %s15, 1
    %p59 = por %p57, %p58
    %p61 = scmp.ne.s32.totalorder %s46, %s60
    %p62 = scmp.eq.s32.totalorder %s15, 0
    %p63 = por %p61, %p62
    %s65 = sadd.s32 %s64, 1
    %p68 = scmp.eq.s32.totalorder %s9, 1
    %p69 = scmp.ne.s32.totalorder %s64, %s66
    %p70 = scmp.eq.s32.totalorder %s9, 0
    %p71 = por %p69, %p70
    %p72 = scmp.ne.s32.totalorder %s64, %s66
    %p73 = scmp.eq.s32.totalorder %s14, 1
    %p74 = por %p72, %p73
    %p75 = scmp.ne.s32.totalorder %s66, %s67
    %p76 = scmp.eq.s32.totalorder %s14, 0
    %p77 = por %p75, %p76
    %p78 = scmp.ne.s32.totalorder %s66, %s67
    %p79 = scmp.eq.s32.totalorder %s15, 1
    %p80 = por %p78, %p79
    %p82 = scmp.ne.s32.totalorder %s67, %s81
    %p83 = scmp.eq.s32.totalorder %s15, 0
    %p84 = por %p82, %p83
    %s85 = ssub.s32 %s9, %s16
    %p86 = scmp.eq.s32.totalorder %s85, 0
    %s88 = sadd.s32 %s87, 1
    %s89 = scalar_select %p86, %s87, %s88
    %p92 = pneg %p86
    %p93 = scmp.eq.s32.totalorder %s9, 1
    %p94 = por %p92, %p93
    %p95 = scmp.ne.s32.totalorder %s87, %s90
    %p96 = scmp.eq.s32.totalorder %s9, 0
    %p97 = por %p95, %p96
    %p98 = scmp.ne.s32.totalorder %s87, %s90
    %p99 = scmp.eq.s32.totalorder %s14, 1
    %p100 = por %p98, %p99
    %p101 = scmp.ne.s32.totalorder %s90, %s91
    %p102 = scmp.eq.s32.totalorder %s14, 0
    %p103 = por %p101, %p102
    %p104 = scmp.ne.s32.totalorder %s90, %s91
    %p105 = scmp.eq.s32.totalorder %s15, 1
    %p106 = por %p104, %p105
    %p108 = scmp.ne.s32.totalorder %s91, %s107
    %p109 = scmp.eq.s32.totalorder %s15, 0
    %p110 = por %p108, %p109
    %p111 = scmp.le.s32.totalorder 1, %s9
    %p112 = scmp.lt.s32.totalorder %s9, 3
    %p113 = pnand %p111, %p112
    %p114 = pneg %p113
    // Predicated region
    $region9: #{net_forward.3} parent=5 // pred_check
      _
    $region10: #{net_forward.3} parent=5 // pred_check_branch
      %116 = sbr.rel (%p113) target = $region12
    $region11: #{net_forward.3} parent=5 // pred_region
      %s117 = ssub.s32 %s9, 1
      // Predicated region
      $region13: #{net_forward.3} parent=11 // pred_check
        %p118 = pneg %p56
      $region14: #{net_forward.3} parent=11 // pred_check_branch
        %120 = sbr.rel (%p118) target = $region16
      $region15: #{net_forward.3} parent=11 // pred_region
        _
      $region16: #{net_forward.3} parent=11 // pred_fallthru
        _
      // Predicated region
      $region17: #{net_forward.3} parent=11 // pred_check
        %p121 = pneg %p77
      $region18: #{net_forward.3} parent=11 // pred_check_branch
        %123 = sbr.rel (%p121) target = $region20
      $region19: #{net_forward.3} parent=11 // pred_region
        _
      $region20: #{net_forward.3} parent=11 // pred_fallthru
        _
    $region12: #{net_forward.3} parent=5 // pred_fallthru
      _
    %p124 = scmp.lt.s32.totalorder %s9, 2
    // Predicated region
    $region21: #{net_forward.3} parent=5 // pred_check
      %p125 = pneg %p124
    $region22: #{net_forward.3} parent=5 // pred_check_branch
      %127 = sbr.rel (%p125) target = $region24
    $region23: #{net_forward.3} parent=5 // pred_region
      // Predicated region
      $region25: #{net_forward.3} parent=23 // pred_check
        %p128 = pneg %p29
      $region26: #{net_forward.3} parent=23 // pred_check_branch
        %130 = sbr.rel (%p128) target = $region28
      $region27: #{net_forward.3} parent=23 // pred_region
        %s131 = smul.u32 128, %s9
        %p132 = scmp.lt.s32.totalorder %s131, 255
        %s133 = scalar_select %p132, %s131, 255
        %s134 = smul.addr %s133, 4
        %s135 = scalar_lea.vmem %s0, %s134
        %s136 = smul.u32 128, %s9
      $region28: #{net_forward.3} parent=23 // pred_fallthru
        _
    $region24: #{net_forward.3} parent=5 // pred_fallthru
      _
    %p137 = scmp.le.s32.totalorder 1, %s9
    %p138 = scmp.lt.s32.totalorder %s9, 3
    %p139 = pnand %p137, %p138
    %p140 = pneg %p139
    // Predicated region
    $region29: #{net_forward.3} parent=5 // pred_check
      _
    $region30: #{net_forward.3} parent=5 // pred_check_branch
      %142 = sbr.rel (%p139) target = $region32
    $region31: #{net_forward.3} parent=5 // pred_region
      %s143 = ssub.s32 %s9, 1
      %s144 = smul.u32 128, %s14
      %p145 = scmp.lt.s32.totalorder %s144, 255
      %s146 = scalar_select %p145, %s144, 255
      %s147 = smul.addr %s146, 4
      %s148 = scalar_lea.vmem %s0, %s147
      %p149 = pneg %p35
      %p150 = pneg %p32
      %p151 = pneg %p56
      %p152 = pneg %p53
      %p153 = pneg %p77
      %p154 = pneg %p74
      %p155 = pneg %p103
      %p156 = pneg %p100
      %s157 = smul.u32 32, %s14
      %p158 = scmp.lt.s32.totalorder %s157, 63
      %s159 = scalar_select %p158, %s157, 63
      %s160 = smul.addr %s159, 4
      %s161 = scalar_lea.vmem %s3, %s160
      %s162 = smul.u32 128, %s14
      %p163 = scmp.lt.s32.totalorder %s162, 255
      %s164 = scalar_select %p163, %s162, 255
      %s165 = smul.addr %s164, 4
      %s166 = scalar_lea.vmem %s0, %s165
      %s167 = smul.u32 128, %s14
      %s168 = smul.u32 32, %s14
      %p169 = scmp.lt.s32.totalorder %s168, 63
      %s170 = scalar_select %p169, %s168, 63
      %s171 = smul.addr %s170, 4
      %s172 = scalar_lea.vmem %s3, %s171
      %s173 = smul.u32 32, %s14
      %v175 = vld [vmem:[%s166] sm:$0xf]
      %v176 = vld [vmem:[%s166 + $0x4] sm:$0xf]
      %v177 = vld [vmem:[%s166 + $0x8] sm:$0xf]
      %v178 = vld [vmem:[%s166 + $0xc] sm:$0xf]
      %v179 = vld [vmem:[%s166 + $0x10] sm:$0xf]
      %v180 = vld [vmem:[%s166 + $0x14] sm:$0xf]
      %v181 = vld [vmem:[%s166 + $0x18] sm:$0xf]
      %v182 = vld [vmem:[%s166 + $0x1c] sm:$0xf]
      %v183 = vld [vmem:[%s166 + $0x20] sm:$0xf]
      %v184 = vld [vmem:[%s166 + $0x24] sm:$0xf]
      %v185 = vld [vmem:[%s166 + $0x28] sm:$0xf]
      %v186 = vld [vmem:[%s166 + $0x2c] sm:$0xf]
      %v187 = vld [vmem:[%s166 + $0x30] sm:$0xf]
      %v188 = vld [vmem:[%s166 + $0x34] sm:$0xf]
      %v189 = vld [vmem:[%s166 + $0x38] sm:$0xf]
      %v190 = vld [vmem:[%s166 + $0x3c] sm:$0xf]
      %v191 = vld [vmem:[%s166 + $0x40] sm:$0xf]
      %v192 = vld [vmem:[%s166 + $0x44] sm:$0xf]
      %v193 = vld [vmem:[%s166 + $0x48] sm:$0xf]
      %v194 = vld [vmem:[%s166 + $0x4c] sm:$0xf]
      %v195 = vld [vmem:[%s166 + $0x50] sm:$0xf]
      %v196 = vld [vmem:[%s166 + $0x54] sm:$0xf]
      %v197 = vld [vmem:[%s166 + $0x58] sm:$0xf]
      %v198 = vld [vmem:[%s166 + $0x5c] sm:$0xf]
      %v199 = vld [vmem:[%s166 + $0x60] sm:$0xf]
      %v200 = vld [vmem:[%s166 + $0x64] sm:$0xf]
      %v201 = vld [vmem:[%s166 + $0x68] sm:$0xf]
      %v202 = vld [vmem:[%s166 + $0x6c] sm:$0xf]
      %v203 = vld [vmem:[%s166 + $0x70] sm:$0xf]
      %v204 = vld [vmem:[%s166 + $0x74] sm:$0xf]
      %v205 = vld [vmem:[%s166 + $0x78] sm:$0xf]
      %v206 = vld [vmem:[%s166 + $0x7c] sm:$0xf]
      %v207 = vld [vmem:[%s166 + $0x80] sm:$0xf]
      %v208 = vld [vmem:[%s166 + $0x84] sm:$0xf]
      %v209 = vld [vmem:[%s166 + $0x88] sm:$0xf]
      %v210 = vld [vmem:[%s166 + $0x8c] sm:$0xf]
      %v211 = vld [vmem:[%s166 + $0x90] sm:$0xf]
      %v212 = vld [vmem:[%s166 + $0x94] sm:$0xf]
      %v213 = vld [vmem:[%s166 + $0x98] sm:$0xf]
      %v214 = vld [vmem:[%s166 + $0x9c] sm:$0xf]
      %v215 = vld [vmem:[%s166 + $0xa0] sm:$0xf]
      %v216 = vld [vmem:[%s166 + $0xa4] sm:$0xf]
      %v217 = vld [vmem:[%s166 + $0xa8] sm:$0xf]
      %v218 = vld [vmem:[%s166 + $0xac] sm:$0xf]
      %v219 = vld [vmem:[%s166 + $0xb0] sm:$0xf]
      %v220 = vld [vmem:[%s166 + $0xb4] sm:$0xf]
      %v221 = vld [vmem:[%s166 + $0xb8] sm:$0xf]
      %v222 = vld [vmem:[%s166 + $0xbc] sm:$0xf]
      %v223 = vld [vmem:[%s166 + $0xc0] sm:$0xf]
      %v224 = vld [vmem:[%s166 + $0xc4] sm:$0xf]
      %v225 = vld [vmem:[%s166 + $0xc8] sm:$0xf]
      %v226 = vld [vmem:[%s166 + $0xcc] sm:$0xf]
      %v227 = vld [vmem:[%s166 + $0xd0] sm:$0xf]
      %v228 = vld [vmem:[%s166 + $0xd4] sm:$0xf]
      %v229 = vld [vmem:[%s166 + $0xd8] sm:$0xf]
      %v230 = vld [vmem:[%s166 + $0xdc] sm:$0xf]
      %v231 = vld [vmem:[%s166 + $0xe0] sm:$0xf]
      %v232 = vld [vmem:[%s166 + $0xe4] sm:$0xf]
      %v233 = vld [vmem:[%s166 + $0xe8] sm:$0xf]
      %v234 = vld [vmem:[%s166 + $0xec] sm:$0xf]
      %v235 = vld [vmem:[%s166 + $0xf0] sm:$0xf]
      %v236 = vld [vmem:[%s166 + $0xf4] sm:$0xf]
      %v237 = vld [vmem:[%s166 + $0xf8] sm:$0xf]
      %v238 = vld [vmem:[%s166 + $0xfc] sm:$0xf]
      %v239 = vld [vmem:[%s166 + $0x100] sm:$0xf]
      %v240 = vld [vmem:[%s166 + $0x104] sm:$0xf]
      %v241 = vld [vmem:[%s166 + $0x108] sm:$0xf]
      %v242 = vld [vmem:[%s166 + $0x10c] sm:$0xf]
      %v243 = vld [vmem:[%s166 + $0x110] sm:$0xf]
      %v244 = vld [vmem:[%s166 + $0x114] sm:$0xf]
      %v245 = vld [vmem:[%s166 + $0x118] sm:$0xf]
      %v246 = vld [vmem:[%s166 + $0x11c] sm:$0xf]
      %v247 = vld [vmem:[%s166 + $0x120] sm:$0xf]
      %v248 = vld [vmem:[%s166 + $0x124] sm:$0xf]
      %v249 = vld [vmem:[%s166 + $0x128] sm:$0xf]
      %v250 = vld [vmem:[%s166 + $0x12c] sm:$0xf]
      %v251 = vld [vmem:[%s166 + $0x130] sm:$0xf]
      %v252 = vld [vmem:[%s166 + $0x134] sm:$0xf]
      %v253 = vld [vmem:[%s166 + $0x138] sm:$0xf]
      %v254 = vld [vmem:[%s166 + $0x13c] sm:$0xf]
      %v255 = vld [vmem:[%s166 + $0x140] sm:$0xf]
      %v256 = vld [vmem:[%s166 + $0x144] sm:$0xf]
      %v257 = vld [vmem:[%s166 + $0x148] sm:$0xf]
      %v258 = vld [vmem:[%s166 + $0x14c] sm:$0xf]
      %v259 = vld [vmem:[%s166 + $0x150] sm:$0xf]
      %v260 = vld [vmem:[%s166 + $0x154] sm:$0xf]
      %v261 = vld [vmem:[%s166 + $0x158] sm:$0xf]
      %v262 = vld [vmem:[%s166 + $0x15c] sm:$0xf]
      %v263 = vld [vmem:[%s166 + $0x160] sm:$0xf]
      %v264 = vld [vmem:[%s166 + $0x164] sm:$0xf]
      %v265 = vld [vmem:[%s166 + $0x168] sm:$0xf]
      %v266 = vld [vmem:[%s166 + $0x16c] sm:$0xf]
      %v267 = vld [vmem:[%s166 + $0x170] sm:$0xf]
      %v268 = vld [vmem:[%s166 + $0x174] sm:$0xf]
      %v269 = vld [vmem:[%s166 + $0x178] sm:$0xf]
      %v270 = vld [vmem:[%s166 + $0x17c] sm:$0xf]
      %v271 = vld [vmem:[%s166 + $0x180] sm:$0xf]
      %v272 = vld [vmem:[%s166 + $0x184] sm:$0xf]
      %v273 = vld [vmem:[%s166 + $0x188] sm:$0xf]
      %v274 = vld [vmem:[%s166 + $0x18c] sm:$0xf]
      %v275 = vld [vmem:[%s166 + $0x190] sm:$0xf]
      %v276 = vld [vmem:[%s166 + $0x194] sm:$0xf]
      %v277 = vld [vmem:[%s166 + $0x198] sm:$0xf]
      %v278 = vld [vmem:[%s166 + $0x19c] sm:$0xf]
      %v279 = vld [vmem:[%s166 + $0x1a0] sm:$0xf]
      %v280 = vld [vmem:[%s166 + $0x1a4] sm:$0xf]
      %v281 = vld [vmem:[%s166 + $0x1a8] sm:$0xf]
      %v282 = vld [vmem:[%s166 + $0x1ac] sm:$0xf]
      %v283 = vld [vmem:[%s166 + $0x1b0] sm:$0xf]
      %v284 = vld [vmem:[%s166 + $0x1b4] sm:$0xf]
      %v285 = vld [vmem:[%s166 + $0x1b8] sm:$0xf]
      %v286 = vld [vmem:[%s166 + $0x1bc] sm:$0xf]
      %v287 = vld [vmem:[%s166 + $0x1c0] sm:$0xf]
      %v288 = vld [vmem:[%s166 + $0x1c4] sm:$0xf]
      %v289 = vld [vmem:[%s166 + $0x1c8] sm:$0xf]
      %v290 = vld [vmem:[%s166 + $0x1cc] sm:$0xf]
      %v291 = vld [vmem:[%s166 + $0x1d0] sm:$0xf]
      %v292 = vld [vmem:[%s166 + $0x1d4] sm:$0xf]
      %v293 = vld [vmem:[%s166 + $0x1d8] sm:$0xf]
      %v294 = vld [vmem:[%s166 + $0x1dc] sm:$0xf]
      %v295 = vld [vmem:[%s166 + $0x1e0] sm:$0xf]
      %v296 = vld [vmem:[%s166 + $0x1e4] sm:$0xf]
      %v297 = vld [vmem:[%s166 + $0x1e8] sm:$0xf]
      %v298 = vld [vmem:[%s166 + $0x1ec] sm:$0xf]
      %v299 = vld [vmem:[%s166 + $0x1f0] sm:$0xf]
      %v300 = vld [vmem:[%s166 + $0x1f4] sm:$0xf]
      %v301 = vld [vmem:[%s166 + $0x1f8] sm:$0xf]
      %v302 = vld [vmem:[%s166 + $0x1fc] sm:$0xf]
      %v303 = vld [vmem:[%s1] sm:$0xf]
      %v304 = vld [vmem:[%s1 + $0x4] sm:$0xf]
      %v305 = vld [vmem:[%s1 + $0x8] sm:$0xf]
      %v306 = vld [vmem:[%s1 + $0xc] sm:$0xf]
      %v307 = vld [vmem:[%s1 + $0x10] sm:$0xf]
      %v308 = vld [vmem:[%s1 + $0x14] sm:$0xf]
      %v309 = vld [vmem:[%s1 + $0x18] sm:$0xf]
      %v310 = vld [vmem:[%s1 + $0x1c] sm:$0xf]
      %v311 = vld [vmem:[%s1 + $0x20] sm:$0xf]
      %v312 = vld [vmem:[%s1 + $0x24] sm:$0xf]
      %v313 = vld [vmem:[%s1 + $0x28] sm:$0xf]
      %v314 = vld [vmem:[%s1 + $0x2c] sm:$0xf]
      %v315 = vld [vmem:[%s1 + $0x30] sm:$0xf]
      %v316 = vld [vmem:[%s1 + $0x34] sm:$0xf]
      %v317 = vld [vmem:[%s1 + $0x38] sm:$0xf]
      %v318 = vld [vmem:[%s1 + $0x3c] sm:$0xf]
      %v447 = vunpack.c.l.b16 %v175
      %v448 = vunpack.c.l.b16 %v176
      %v449 = vunpack.c.l.b16 %v177
      %v450 = vunpack.c.l.b16 %v178
      %v451 = vunpack.c.l.b16 %v179
      %v452 = vunpack.c.l.b16 %v180
      %v453 = vunpack.c.l.b16 %v181
      %v454 = vunpack.c.l.b16 %v182
      %v455 = vunpack.c.l.b16 %v183
      %v456 = vunpack.c.l.b16 %v184
      %v457 = vunpack.c.l.b16 %v185
      %v458 = vunpack.c.l.b16 %v186
      %v459 = vunpack.c.l.b16 %v187
      %v460 = vunpack.c.l.b16 %v188
      %v461 = vunpack.c.l.b16 %v189
      %v462 = vunpack.c.l.b16 %v190
      %v463 = vunpack.c.l.b16 %v191
      %v464 = vunpack.c.l.b16 %v192
      %v465 = vunpack.c.l.b16 %v193
      %v466 = vunpack.c.l.b16 %v194
      %v467 = vunpack.c.l.b16 %v195
      %v468 = vunpack.c.l.b16 %v196
      %v469 = vunpack.c.l.b16 %v197
      %v470 = vunpack.c.l.b16 %v198
      %v471 = vunpack.c.l.b16 %v199
      %v472 = vunpack.c.l.b16 %v200
      %v473 = vunpack.c.l.b16 %v201
      %v474 = vunpack.c.l.b16 %v202
      %v475 = vunpack.c.l.b16 %v203
      %v476 = vunpack.c.l.b16 %v204
      %v477 = vunpack.c.l.b16 %v205
      %v478 = vunpack.c.l.b16 %v206
      %v479 = vunpack.c.l.b16 %v207
      %v480 = vunpack.c.l.b16 %v208
      %v481 = vunpack.c.l.b16 %v209
      %v482 = vunpack.c.l.b16 %v210
      %v483 = vunpack.c.l.b16 %v211
      %v484 = vunpack.c.l.b16 %v212
      %v485 = vunpack.c.l.b16 %v213
      %v486 = vunpack.c.l.b16 %v214
      %v487 = vunpack.c.l.b16 %v215
      %v488 = vunpack.c.l.b16 %v216
      %v489 = vunpack.c.l.b16 %v217
      %v490 = vunpack.c.l.b16 %v218
      %v491 = vunpack.c.l.b16 %v219
      %v492 = vunpack.c.l.b16 %v220
      %v493 = vunpack.c.l.b16 %v221
      %v494 = vunpack.c.l.b16 %v222
      %v495 = vunpack.c.l.b16 %v223
      %v496 = vunpack.c.l.b16 %v224
      %v497 = vunpack.c.l.b16 %v225
      %v498 = vunpack.c.l.b16 %v226
      %v499 = vunpack.c.l.b16 %v227
      %v500 = vunpack.c.l.b16 %v228
      %v501 = vunpack.c.l.b16 %v229
      %v502 = vunpack.c.l.b16 %v230
      %v503 = vunpack.c.l.b16 %v231
      %v504 = vunpack.c.l.b16 %v232
      %v505 = vunpack.c.l.b16 %v233
      %v506 = vunpack.c.l.b16 %v234
      %v507 = vunpack.c.l.b16 %v235
      %v508 = vunpack.c.l.b16 %v236
      %v509 = vunpack.c.l.b16 %v237
      %v510 = vunpack.c.l.b16 %v238
      %v511 = vunpack.c.l.b16 %v239
      %v512 = vunpack.c.l.b16 %v240
      %v513 = vunpack.c.l.b16 %v241
      %v514 = vunpack.c.l.b16 %v242
      %v515 = vunpack.c.l.b16 %v243
      %v516 = vunpack.c.l.b16 %v244
      %v517 = vunpack.c.l.b16 %v245
      %v518 = vunpack.c.l.b16 %v246
      %v519 = vunpack.c.l.b16 %v247
      %v520 = vunpack.c.l.b16 %v248
      %v521 = vunpack.c.l.b16 %v249
      %v522 = vunpack.c.l.b16 %v250
      %v523 = vunpack.c.l.b16 %v251
      %v524 = vunpack.c.l.b16 %v252
      %v525 = vunpack.c.l.b16 %v253
      %v526 = vunpack.c.l.b16 %v254
      %v527 = vunpack.c.l.b16 %v255
      %v528 = vunpack.c.l.b16 %v256
      %v529 = vunpack.c.l.b16 %v257
      %v530 = vunpack.c.l.b16 %v258
      %v531 = vunpack.c.l.b16 %v259
      %v532 = vunpack.c.l.b16 %v260
      %v533 = vunpack.c.l.b16 %v261
      %v534 = vunpack.c.l.b16 %v262
      %v535 = vunpack.c.l.b16 %v263
      %v536 = vunpack.c.l.b16 %v264
      %v537 = vunpack.c.l.b16 %v265
      %v538 = vunpack.c.l.b16 %v266
      %v539 = vunpack.c.l.b16 %v267
      %v540 = vunpack.c.l.b16 %v268
      %v541 = vunpack.c.l.b16 %v269
      %v542 = vunpack.c.l.b16 %v270
      %v543 = vunpack.c.l.b16 %v271
      %v544 = vunpack.c.l.b16 %v272
      %v545 = vunpack.c.l.b16 %v273
      %v546 = vunpack.c.l.b16 %v274
      %v547 = vunpack.c.l.b16 %v275
      %v548 = vunpack.c.l.b16 %v276
      %v549 = vunpack.c.l.b16 %v277
      %v550 = vunpack.c.l.b16 %v278
      %v551 = vunpack.c.l.b16 %v279
      %v552 = vunpack.c.l.b16 %v280
      %v553 = vunpack.c.l.b16 %v281
      %v554 = vunpack.c.l.b16 %v282
      %v555 = vunpack.c.l.b16 %v283
      %v556 = vunpack.c.l.b16 %v284
      %v557 = vunpack.c.l.b16 %v285
      %v558 = vunpack.c.l.b16 %v286
      %v559 = vunpack.c.l.b16 %v287
      %v560 = vunpack.c.l.b16 %v288
      %v561 = vunpack.c.l.b16 %v289
      %v562 = vunpack.c.l.b16 %v290
      %v563 = vunpack.c.l.b16 %v291
      %v564 = vunpack.c.l.b16 %v292
      %v565 = vunpack.c.l.b16 %v293
      %v566 = vunpack.c.l.b16 %v294
      %v567 = vunpack.c.l.b16 %v295
      %v568 = vunpack.c.l.b16 %v296
      %v569 = vunpack.c.l.b16 %v297
      %v570 = vunpack.c.l.b16 %v298
      %v571 = vunpack.c.l.b16 %v299
      %v572 = vunpack.c.l.b16 %v300
      %v573 = vunpack.c.l.b16 %v301
      %v574 = vunpack.c.l.b16 %v302
      %v575 = vpack.c.b16 %v448, %v447
      %v576 = vpack.c.b16 %v450, %v449
      %v577 = vpack.c.b16 %v452, %v451
      %v578 = vpack.c.b16 %v454, %v453
      %v579 = vpack.c.b16 %v456, %v455
      %v580 = vpack.c.b16 %v458, %v457
      %v581 = vpack.c.b16 %v460, %v459
      %v582 = vpack.c.b16 %v462, %v461
      %v583 = vpack.c.b16 %v464, %v463
      %v584 = vpack.c.b16 %v466, %v465
      %v585 = vpack.c.b16 %v468, %v467
      %v586 = vpack.c.b16 %v470, %v469
      %v587 = vpack.c.b16 %v472, %v471
      %v588 = vpack.c.b16 %v474, %v473
      %v589 = vpack.c.b16 %v476, %v475
      %v590 = vpack.c.b16 %v478, %v477
      %v591 = vpack.c.b16 %v480, %v479
      %v592 = vpack.c.b16 %v482, %v481
      %v593 = vpack.c.b16 %v484, %v483
      %v594 = vpack.c.b16 %v486, %v485
      %v595 = vpack.c.b16 %v488, %v487
      %v596 = vpack.c.b16 %v490, %v489
      %v597 = vpack.c.b16 %v492, %v491
      %v598 = vpack.c.b16 %v494, %v493
      %v599 = vpack.c.b16 %v496, %v495
      %v600 = vpack.c.b16 %v498, %v497
      %v601 = vpack.c.b16 %v500, %v499
      %v602 = vpack.c.b16 %v502, %v501
      %v603 = vpack.c.b16 %v504, %v503
      %v604 = vpack.c.b16 %v506, %v505
      %v605 = vpack.c.b16 %v508, %v507
      %v606 = vpack.c.b16 %v510, %v509
      %v607 = vpack.c.b16 %v512, %v511
      %v608 = vpack.c.b16 %v514, %v513
      %v609 = vpack.c.b16 %v516, %v515
      %v610 = vpack.c.b16 %v518, %v517
      %v611 = vpack.c.b16 %v520, %v519
      %v612 = vpack.c.b16 %v522, %v521
      %v613 = vpack.c.b16 %v524, %v523
      %v614 = vpack.c.b16 %v526, %v525
      %v615 = vpack.c.b16 %v528, %v527
      %v616 = vpack.c.b16 %v530, %v529
      %v617 = vpack.c.b16 %v532, %v531
      %v618 = vpack.c.b16 %v534, %v533
      %v619 = vpack.c.b16 %v536, %v535
      %v620 = vpack.c.b16 %v538, %v537
      %v621 = vpack.c.b16 %v540, %v539
      %v622 = vpack.c.b16 %v542, %v541
      %v623 = vpack.c.b16 %v544, %v543
      %v624 = vpack.c.b16 %v546, %v545
      %v625 = vpack.c.b16 %v548, %v547
      %v626 = vpack.c.b16 %v550, %v549
      %v627 = vpack.c.b16 %v552, %v551
      %v628 = vpack.c.b16 %v554, %v553
      %v629 = vpack.c.b16 %v556, %v555
      %v630 = vpack.c.b16 %v558, %v557
      %v631 = vpack.c.b16 %v560, %v559
      %v632 = vpack.c.b16 %v562, %v561
      %v633 = vpack.c.b16 %v564, %v563
      %v634 = vpack.c.b16 %v566, %v565
      %v635 = vpack.c.b16 %v568, %v567
      %v636 = vpack.c.b16 %v570, %v569
      %v637 = vpack.c.b16 %v572, %v571
      %v638 = vpack.c.b16 %v574, %v573
      %v719 = vunpack.c.l.b16 %v303
      %v720 = vunpack.c.l.b16 %v304
      %v721 = vunpack.c.l.b16 %v305
      %v722 = vunpack.c.l.b16 %v306
      %v723 = vunpack.c.l.b16 %v307
      %v724 = vunpack.c.l.b16 %v308
      %v725 = vunpack.c.l.b16 %v309
      %v726 = vunpack.c.l.b16 %v310
      %v727 = vunpack.c.l.b16 %v311
      %v728 = vunpack.c.l.b16 %v312
      %v729 = vunpack.c.l.b16 %v313
      %v730 = vunpack.c.l.b16 %v314
      %v731 = vunpack.c.l.b16 %v315
      %v732 = vunpack.c.l.b16 %v316
      %v733 = vunpack.c.l.b16 %v317
      %v734 = vunpack.c.l.b16 %v318
      %v735 = vpack.c.b16 %v720, %v719
      %v736 = vpack.c.b16 %v722, %v721
      %v737 = vpack.c.b16 %v724, %v723
      %v738 = vpack.c.b16 %v726, %v725
      %v739 = vpack.c.b16 %v728, %v727
      %v740 = vpack.c.b16 %v730, %v729
      %v741 = vpack.c.b16 %v732, %v731
      %v742 = vpack.c.b16 %v734, %v733
      %751 = vmatprep.subr.bf16.mxu0 0
      %752 = vmatpush1.bf16.msra.mxu0 %v735
      %753 = vmatprep.subr.bf16.mxu0 0
      %754 = vmatpush1.bf16.msra.mxu0 %v736
      %755 = vmatprep.subr.bf16.mxu0 0
      %756 = vmatpush1.bf16.msra.mxu0 %v737
      %757 = vmatprep.subr.bf16.mxu0 0
      %758 = vmatpush1.bf16.msra.mxu0 %v738
      %759 = vmatprep.subr.bf16.mxu0 0
      %760 = vmatpush1.bf16.msra.mxu0 %v739
      %761 = vmatprep.subr.bf16.mxu0 0
      %762 = vmatpush1.bf16.msra.mxu0 %v740
      %763 = vmatprep.subr.bf16.mxu0 0
      %764 = vmatpush1.bf16.msra.mxu0 %v741
      %765 = vmatprep.subr.bf16.mxu0 0
      %766 = vmatpush1.bf16.msra.mxu0 %v742
      %767 = vmatprep.subr.bf16.mxu0 0
      %768 = vmatpush1.bf16.msra.mxu0 0
      %769 = vmatprep.subr.bf16.mxu0 0
      %770 = vmatpush1.bf16.msra.mxu0 0
      %771 = vmatprep.subr.bf16.mxu0 0
      %772 = vmatpush1.bf16.msra.mxu0 0
      %773 = vmatprep.subr.bf16.mxu0 0
      %774 = vmatpush1.bf16.msra.mxu0 0
      %775 = vmatprep.subr.bf16.mxu0 0
      %776 = vmatpush1.bf16.msra.mxu0 0
      %777 = vmatprep.subr.bf16.mxu0 0
      %778 = vmatpush1.bf16.msra.mxu0 0
      %779 = vmatprep.subr.bf16.mxu0 0
      %780 = vmatpush1.bf16.msra.mxu0 0
      %781 = vmatprep.subr.bf16.mxu0 0
      %782 = vmatpush1.bf16.msra.mxu0 0
      %783 = vmatprep.mubr.bf16.mxu0 0
      %784 = vmatmul.mubr.bf16.gmra.mrb[0].mxu0 %v575
      %v785 = vpop.f32.mrb[0].mxu0
      %v786 = vadd.f32 0.0, %v785
      %v787 = vpop.f32.mrb[0].mxu0
      %v788 = vpop.f32.mrb[0].mxu0
      %v789 = vadd.f32 0.0, %v788
      %v790 = vpop.f32.mrb[0].mxu0
      %791 = vmatprep.mubr.bf16.mxu0 0
      %792 = vmatmul.mubr.bf16.gmra.mrb[0].mxu0 %v576
      %v793 = vpop.f32.mrb[0].mxu0
      %v794 = vadd.f32 0.0, %v793
      %v795 = vpop.f32.mrb[0].mxu0
      %v796 = vpop.f32.mrb[0].mxu0
      %v797 = vadd.f32 0.0, %v796
      %v798 = vpop.f32.mrb[0].mxu0
      %799 = vmatprep.mubr.bf16.mxu0 0
      %800 = vmatmul.mubr.bf16.gmra.mrb[0].mxu0 %v577
      %v801 = vpop.f32.mrb[0].mxu0
      %v802 = vadd.f32 0.0, %v801
      %v803 = vpop.f32.mrb[0].mxu0
      %v804 = vpop.f32.mrb[0].mxu0
      %v805 = vadd.f32 0.0, %v804
      %v806 = vpop.f32.mrb[0].mxu0
      %807 = vmatprep.mubr.bf16.mxu0 0
      %808 = vmatmul.mubr.bf16.gmra.mrb[0].mxu0 %v578
      %v809 = vpop.f32.mrb[0].mxu0
      %v810 = vadd.f32 0.0, %v809
      %v811 = vpop.f32.mrb[0].mxu0
      %v812 = vpop.f32.mrb[0].mxu0
      %v813 = vadd.f32 0.0, %v812
      %v814 = vpop.f32.mrb[0].mxu0
      %815 = vmatprep.mubr.bf16.mxu0 0
      %816 = vmatmul.mubr.bf16.gmra.mrb[0].mxu0 %v579
      %v817 = vpop.f32.mrb[0].mxu0
      %v818 = vadd.f32 0.0, %v817
      %v819 = vpop.f32.mrb[0].mxu0
      %v820 = vpop.f32.mrb[0].mxu0
      %v821 = vadd.f32 0.0, %v820
      %v822 = vpop.f32.mrb[0].mxu0
      %823 = vmatprep.mubr.bf16.mxu0 0
      %824 = vmatmul.mubr.bf16.gmra.mrb[0].mxu0 %v580
      %v825 = vpop.f32.mrb[0].mxu0
      %v826 = vadd.f32 0.0, %v825
      %v827 = vpop.f32.mrb[0].mxu0
      %v828 = vpop.f32.mrb[0].mxu0
      %v829 = vadd.f32 0.0, %v828
      %v830 = vpop.f32.mrb[0].mxu0
      %831 = vmatprep.mubr.bf16.mxu0 0
      %832 = vmatmul.mubr.bf16.gmra.mrb[0].mxu0 %v581
      %v833 = vpop.f32.mrb[0].mxu0
      %v834 = vadd.f32 0.0, %v833
      %v835 = vpop.f32.mrb[0].mxu0
      %v836 = vpop.f32.mrb[0].mxu0
      %v837 = vadd.f32 0.0, %v836
      %v838 = vpop.f32.mrb[0].mxu0
      %839 = vmatprep.mubr.bf16.mxu0 0
      %840 = vmatmul.mubr.bf16.gmra.mrb[0].mxu0 %v582
      %v841 = vpop.f32.mrb[0].mxu0
      %v842 = vadd.f32 0.0, %v841
      %v843 = vpop.f32.mrb[0].mxu0
      %v844 = vpop.f32.mrb[0].mxu0
      %v845 = vadd.f32 0.0, %v844
      %v846 = vpop.f32.mrb[0].mxu0
      %847 = vmatprep.mubr.bf16.mxu0 0
      %848 = vmatmul.mubr.bf16.gmra.mrb[0].mxu0 %v583
      %v849 = vpop.f32.mrb[0].mxu0
      %v850 = vadd.f32 0.0, %v849
      %v851 = vpop.f32.mrb[0].mxu0
      %v852 = vpop.f32.mrb[0].mxu0
      %v853 = vadd.f32 0.0, %v852
      %v854 = vpop.f32.mrb[0].mxu0
      %855 = vmatprep.mubr.bf16.mxu0 0
      %856 = vmatmul.mubr.bf16.gmra.mrb[0].mxu0 %v584
      %v857 = vpop.f32.mrb[0].mxu0
      %v858 = vadd.f32 0.0, %v857
      %v859 = vpop.f32.mrb[0].mxu0
      %v860 = vpop.f32.mrb[0].mxu0
      %v861 = vadd.f32 0.0, %v860
      %v862 = vpop.f32.mrb[0].mxu0
      %863 = vmatprep.mubr.bf16.mxu0 0
      %864 = vmatmul.mubr.bf16.gmra.mrb[0].mxu0 %v585
      %v865 = vpop.f32.mrb[0].mxu0
      %v866 = vadd.f32 0.0, %v865
      %v867 = vpop.f32.mrb[0].mxu0
      %v868 = vpop.f32.mrb[0].mxu0
      %v869 = vadd.f32 0.0, %v868
      %v870 = vpop.f32.mrb[0].mxu0
      %871 = vmatprep.mubr.bf16.mxu0 0
      %872 = vmatmul.mubr.bf16.gmra.mrb[0].mxu0 %v586
      %v873 = vpop.f32.mrb[0].mxu0
      %v874 = vadd.f32 0.0, %v873
      %v875 = vpop.f32.mrb[0].mxu0
      %v876 = vpop.f32.mrb[0].mxu0
      %v877 = vadd.f32 0.0, %v876
      %v878 = vpop.f32.mrb[0].mxu0
      %879 = vmatprep.mubr.bf16.mxu0 0
      %880 = vmatmul.mubr.bf16.gmra.mrb[0].mxu0 %v587
      %v881 = vpop.f32.mrb[0].mxu0
      %v882 = vadd.f32 0.0, %v881
      %v883 = vpop.f32.mrb[0].mxu0
      %v884 = vpop.f32.mrb[0].mxu0
      %v885 = vadd.f32 0.0, %v884
      %v886 = vpop.f32.mrb[0].mxu0
      %887 = vmatprep.mubr.bf16.mxu0 0
      %888 = vmatmul.mubr.bf16.gmra.mrb[0].mxu0 %v588
      %v889 = vpop.f32.mrb[0].mxu0
      %v890 = vadd.f32 0.0, %v889
      %v891 = vpop.f32.mrb[0].mxu0
      %v892 = vpop.f32.mrb[0].mxu0
      %v893 = vadd.f32 0.0, %v892
      %v894 = vpop.f32.mrb[0].mxu0
      %895 = vmatprep.mubr.bf16.mxu0 0
      %896 = vmatmul.mubr.bf16.gmra.mrb[0].mxu0 %v589
      %v897 = vpop.f32.mrb[0].mxu0
      %v898 = vadd.f32 0.0, %v897
      %v899 = vpop.f32.mrb[0].mxu0
      %v900 = vpop.f32.mrb[0].mxu0
      %v901 = vadd.f32 0.0, %v900
      %v902 = vpop.f32.mrb[0].mxu0
      %903 = vmatprep.mubr.bf16.mxu0 0
      %904 = vmatmul.mubr.bf16.gmra.mrb[0].mxu0 %v590
      %v905 = vpop.f32.mrb[0].mxu0
      %v906 = vadd.f32 0.0, %v905
      %v907 = vpop.f32.mrb[0].mxu0
      %v908 = vpop.f32.mrb[0].mxu0
      %v909 = vadd.f32 0.0, %v908
      %v910 = vpop.f32.mrb[0].mxu0
      %911 = vmatprep.mubr.bf16.mxu0 0
      %912 = vmatmul.mubr.bf16.gmra.mrb[0].mxu0 %v591
      %v913 = vpop.f32.mrb[0].mxu0
      %v914 = vadd.f32 0.0, %v913
      %v915 = vpop.f32.mrb[0].mxu0
      %v916 = vpop.f32.mrb[0].mxu0
      %v917 = vadd.f32 0.0, %v916
      %v918 = vpop.f32.mrb[0].mxu0
      %919 = vmatprep.mubr.bf16.mxu0 0
      %920 = vmatmul.mubr.bf16.gmra.mrb[0].mxu0 %v592
      %v921 = vpop.f32.mrb[0].mxu0
      %v922 = vadd.f32 0.0, %v921
      %v923 = vpop.f32.mrb[0].mxu0
      %v924 = vpop.f32.mrb[0].mxu0
      %v925 = vadd.f32 0.0, %v924
      %v926 = vpop.f32.mrb[0].mxu0
      %927 = vmatprep.mubr.bf16.mxu0 0
      %928 = vmatmul.mubr.bf16.gmra.mrb[0].mxu0 %v593
      %v929 = vpop.f32.mrb[0].mxu0
      %v930 = vadd.f32 0.0, %v929
      %v931 = vpop.f32.mrb[0].mxu0
      %v932 = vpop.f32.mrb[0].mxu0
      %v933 = vadd.f32 0.0, %v932
      %v934 = vpop.f32.mrb[0].mxu0
      %935 = vmatprep.mubr.bf16.mxu0 0
      %936 = vmatmul.mubr.bf16.gmra.mrb[0].mxu0 %v594
      %v937 = vpop.f32.mrb[0].mxu0
      %v938 = vadd.f32 0.0, %v937
      %v939 = vpop.f32.mrb[0].mxu0
      %v940 = vpop.f32.mrb[0].mxu0
      %v941 = vadd.f32 0.0, %v940
      %v942 = vpop.f32.mrb[0].mxu0
      %943 = vmatprep.mubr.bf16.mxu0 0
      %944 = vmatmul.mubr.bf16.gmra.mrb[0].mxu0 %v595
      %v945 = vpop.f32.mrb[0].mxu0
      %v946 = vadd.f32 0.0, %v945
      %v947 = vpop.f32.mrb[0].mxu0
      %v948 = vpop.f32.mrb[0].mxu0
      %v949 = vadd.f32 0.0, %v948
      %v950 = vpop.f32.mrb[0].mxu0
      %951 = vmatprep.mubr.bf16.mxu0 0
      %952 = vmatmul.mubr.bf16.gmra.mrb[0].mxu0 %v596
      %v953 = vpop.f32.mrb[0].mxu0
      %v954 = vadd.f32 0.0, %v953
      %v955 = vpop.f32.mrb[0].mxu0
      %v956 = vpop.f32.mrb[0].mxu0
      %v957 = vadd.f32 0.0, %v956
      %v958 = vpop.f32.mrb[0].mxu0
      %959 = vmatprep.mubr.bf16.mxu0 0
      %960 = vmatmul.mubr.bf16.gmra.mrb[0].mxu0 %v597
      %v961 = vpop.f32.mrb[0].mxu0
      %v962 = vadd.f32 0.0, %v961
      %v963 = vpop.f32.mrb[0].mxu0
      %v964 = vpop.f32.mrb[0].mxu0
      %v965 = vadd.f32 0.0, %v964
      %v966 = vpop.f32.mrb[0].mxu0
      %967 = vmatprep.mubr.bf16.mxu0 0
      %968 = vmatmul.mubr.bf16.gmra.mrb[0].mxu0 %v598
      %v969 = vpop.f32.mrb[0].mxu0
      %v970 = vadd.f32 0.0, %v969
      %v971 = vpop.f32.mrb[0].mxu0
      %v972 = vpop.f32.mrb[0].mxu0
      %v973 = vadd.f32 0.0, %v972
      %v974 = vpop.f32.mrb[0].mxu0
      %975 = vmatprep.mubr.bf16.mxu0 0
      %976 = vmatmul.mubr.bf16.gmra.mrb[0].mxu0 %v599
      %v977 = vpop.f32.mrb[0].mxu0
      %v978 = vadd.f32 0.0, %v977
      %v979 = vpop.f32.mrb[0].mxu0
      %v980 = vpop.f32.mrb[0].mxu0
      %v981 = vadd.f32 0.0, %v980
      %v982 = vpop.f32.mrb[0].mxu0
      %983 = vmatprep.mubr.bf16.mxu0 0
      %984 = vmatmul.mubr.bf16.gmra.mrb[0].mxu0 %v600
      %v985 = vpop.f32.mrb[0].mxu0
      %v986 = vadd.f32 0.0, %v985
      %v987 = vpop.f32.mrb[0].mxu0
      %v988 = vpop.f32.mrb[0].mxu0
      %v989 = vadd.f32 0.0, %v988
      %v990 = vpop.f32.mrb[0].mxu0
      %991 = vmatprep.mubr.bf16.mxu0 0
      %992 = vmatmul.mubr.bf16.gmra.mrb[0].mxu0 %v601
      %v993 = vpop.f32.mrb[0].mxu0
      %v994 = vadd.f32 0.0, %v993
      %v995 = vpop.f32.mrb[0].mxu0
      %v996 = vpop.f32.mrb[0].mxu0
      %v997 = vadd.f32 0.0, %v996
      %v998 = vpop.f32.mrb[0].mxu0
      %999 = vmatprep.mubr.bf16.mxu0 0
      %1000 = vmatmul.mubr.bf16.gmra.mrb[0].mxu0 %v602
      %v1001 = vpop.f32.mrb[0].mxu0
      %v1002 = vadd.f32 0.0, %v1001
      %v1003 = vpop.f32.mrb[0].mxu0
      %v1004 = vpop.f32.mrb[0].mxu0
      %v1005 = vadd.f32 0.0, %v1004
      %v1006 = vpop.f32.mrb[0].mxu0
      %1007 = vmatprep.mubr.bf16.mxu0 0
      %1008 = vmatmul.mubr.bf16.gmra.mrb[0].mxu0 %v603
      %v1009 = vpop.f32.mrb[0].mxu0
      %v1010 = vadd.f32 0.0, %v1009
      %v1011 = vpop.f32.mrb[0].mxu0
      %v1012 = vpop.f32.mrb[0].mxu0
      %v1013 = vadd.f32 0.0, %v1012
      %v1014 = vpop.f32.mrb[0].mxu0
      %1015 = vmatprep.mubr.bf16.mxu0 0
      %1016 = vmatmul.mubr.bf16.gmra.mrb[0].mxu0 %v604
      %v1017 = vpop.f32.mrb[0].mxu0
      %v1018 = vadd.f32 0.0, %v1017
      %v1019 = vpop.f32.mrb[0].mxu0
      %v1020 = vpop.f32.mrb[0].mxu0
      %v1021 = vadd.f32 0.0, %v1020
      %v1022 = vpop.f32.mrb[0].mxu0
      %1023 = vmatprep.mubr.bf16.mxu0 0
      %1024 = vmatmul.mubr.bf16.gmra.mrb[0].mxu0 %v605
      %v1025 = vpop.f32.mrb[0].mxu0
      %v1026 = vadd.f32 0.0, %v1025
      %v1027 = vpop.f32.mrb[0].mxu0
      %v1028 = vpop.f32.mrb[0].mxu0
      %v1029 = vadd.f32 0.0, %v1028
      %v1030 = vpop.f32.mrb[0].mxu0
      %1031 = vmatprep.mubr.bf16.mxu0 0
      %1032 = vmatmul.mubr.bf16.gmra.mrb[0].mxu0 %v606
      %v1033 = vpop.f32.mrb[0].mxu0
      %v1034 = vadd.f32 0.0, %v1033
      %v1035 = vpop.f32.mrb[0].mxu0
      %v1036 = vpop.f32.mrb[0].mxu0
      %v1037 = vadd.f32 0.0, %v1036
      %v1038 = vpop.f32.mrb[0].mxu0
      %1039 = vmatprep.mubr.bf16.mxu0 0
      %1040 = vmatmul.mubr.bf16.gmra.mrb[0].mxu0 %v607
      %v1041 = vpop.f32.mrb[0].mxu0
      %v1042 = vadd.f32 0.0, %v1041
      %v1043 = vpop.f32.mrb[0].mxu0
      %v1044 = vpop.f32.mrb[0].mxu0
      %v1045 = vadd.f32 0.0, %v1044
      %v1046 = vpop.f32.mrb[0].mxu0
      %1047 = vmatprep.mubr.bf16.mxu0 0
      %1048 = vmatmul.mubr.bf16.gmra.mrb[0].mxu0 %v608
      %v1049 = vpop.f32.mrb[0].mxu0
      %v1050 = vadd.f32 0.0, %v1049
      %v1051 = vpop.f32.mrb[0].mxu0
      %v1052 = vpop.f32.mrb[0].mxu0
      %v1053 = vadd.f32 0.0, %v1052
      %v1054 = vpop.f32.mrb[0].mxu0
      %1055 = vmatprep.mubr.bf16.mxu0 0
      %1056 = vmatmul.mubr.bf16.gmra.mrb[0].mxu0 %v609
      %v1057 = vpop.f32.mrb[0].mxu0
      %v1058 = vadd.f32 0.0, %v1057
      %v1059 = vpop.f32.mrb[0].mxu0
      %v1060 = vpop.f32.mrb[0].mxu0
      %v1061 = vadd.f32 0.0, %v1060
      %v1062 = vpop.f32.mrb[0].mxu0
      %1063 = vmatprep.mubr.bf16.mxu0 0
      %1064 = vmatmul.mubr.bf16.gmra.mrb[0].mxu0 %v610
      %v1065 = vpop.f32.mrb[0].mxu0
      %v1066 = vadd.f32 0.0, %v1065
      %v1067 = vpop.f32.mrb[0].mxu0
      %v1068 = vpop.f32.mrb[0].mxu0
      %v1069 = vadd.f32 0.0, %v1068
      %v1070 = vpop.f32.mrb[0].mxu0
      %1071 = vmatprep.mubr.bf16.mxu0 0
      %1072 = vmatmul.mubr.bf16.gmra.mrb[0].mxu0 %v611
      %v1073 = vpop.f32.mrb[0].mxu0
      %v1074 = vadd.f32 0.0, %v1073
      %v1075 = vpop.f32.mrb[0].mxu0
      %v1076 = vpop.f32.mrb[0].mxu0
      %v1077 = vadd.f32 0.0, %v1076
      %v1078 = vpop.f32.mrb[0].mxu0
      %1079 = vmatprep.mubr.bf16.mxu0 0
      %1080 = vmatmul.mubr.bf16.gmra.mrb[0].mxu0 %v612
      %v1081 = vpop.f32.mrb[0].mxu0
      %v1082 = vadd.f32 0.0, %v1081
      %v1083 = vpop.f32.mrb[0].mxu0
      %v1084 = vpop.f32.mrb[0].mxu0
      %v1085 = vadd.f32 0.0, %v1084
      %v1086 = vpop.f32.mrb[0].mxu0
      %1087 = vmatprep.mubr.bf16.mxu0 0
      %1088 = vmatmul.mubr.bf16.gmra.mrb[0].mxu0 %v613
      %v1089 = vpop.f32.mrb[0].mxu0
      %v1090 = vadd.f32 0.0, %v1089
      %v1091 = vpop.f32.mrb[0].mxu0
      %v1092 = vpop.f32.mrb[0].mxu0
      %v1093 = vadd.f32 0.0, %v1092
      %v1094 = vpop.f32.mrb[0].mxu0
      %1095 = vmatprep.mubr.bf16.mxu0 0
      %1096 = vmatmul.mubr.bf16.gmra.mrb[0].mxu0 %v614
      %v1097 = vpop.f32.mrb[0].mxu0
      %v1098 = vadd.f32 0.0, %v1097
      %v1099 = vpop.f32.mrb[0].mxu0
      %v1100 = vpop.f32.mrb[0].mxu0
      %v1101 = vadd.f32 0.0, %v1100
      %v1102 = vpop.f32.mrb[0].mxu0
      %1103 = vmatprep.mubr.bf16.mxu0 0
      %1104 = vmatmul.mubr.bf16.gmra.mrb[0].mxu0 %v615
      %v1105 = vpop.f32.mrb[0].mxu0
      %v1106 = vadd.f32 0.0, %v1105
      %v1107 = vpop.f32.mrb[0].mxu0
      %v1108 = vpop.f32.mrb[0].mxu0
      %v1109 = vadd.f32 0.0, %v1108
      %v1110 = vpop.f32.mrb[0].mxu0
      %1111 = vmatprep.mubr.bf16.mxu0 0
      %1112 = vmatmul.mubr.bf16.gmra.mrb[0].mxu0 %v616
      %v1113 = vpop.f32.mrb[0].mxu0
      %v1114 = vadd.f32 0.0, %v1113
      %v1115 = vpop.f32.mrb[0].mxu0
      %v1116 = vpop.f32.mrb[0].mxu0
      %v1117 = vadd.f32 0.0, %v1116
      %v1118 = vpop.f32.mrb[0].mxu0
      %1119 = vmatprep.mubr.bf16.mxu0 0
      %1120 = vmatmul.mubr.bf16.gmra.mrb[0].mxu0 %v617
      %v1121 = vpop.f32.mrb[0].mxu0
      %v1122 = vadd.f32 0.0, %v1121
      %v1123 = vpop.f32.mrb[0].mxu0
      %v1124 = vpop.f32.mrb[0].mxu0
      %v1125 = vadd.f32 0.0, %v1124
      %v1126 = vpop.f32.mrb[0].mxu0
      %1127 = vmatprep.mubr.bf16.mxu0 0
      %1128 = vmatmul.mubr.bf16.gmra.mrb[0].mxu0 %v618
      %v1129 = vpop.f32.mrb[0].mxu0
      %v1130 = vadd.f32 0.0, %v1129
      %v1131 = vpop.f32.mrb[0].mxu0
      %v1132 = vpop.f32.mrb[0].mxu0
      %v1133 = vadd.f32 0.0, %v1132
      %v1134 = vpop.f32.mrb[0].mxu0
      %1135 = vmatprep.mubr.bf16.mxu0 0
      %1136 = vmatmul.mubr.bf16.gmra.mrb[0].mxu0 %v619
      %v1137 = vpop.f32.mrb[0].mxu0
      %v1138 = vadd.f32 0.0, %v1137
      %v1139 = vpop.f32.mrb[0].mxu0
      %v1140 = vpop.f32.mrb[0].mxu0
      %v1141 = vadd.f32 0.0, %v1140
      %v1142 = vpop.f32.mrb[0].mxu0
      %1143 = vmatprep.mubr.bf16.mxu0 0
      %1144 = vmatmul.mubr.bf16.gmra.mrb[0].mxu0 %v620
      %v1145 = vpop.f32.mrb[0].mxu0
      %v1146 = vadd.f32 0.0, %v1145
      %v1147 = vpop.f32.mrb[0].mxu0
      %v1148 = vpop.f32.mrb[0].mxu0
      %v1149 = vadd.f32 0.0, %v1148
      %v1150 = vpop.f32.mrb[0].mxu0
      %1151 = vmatprep.mubr.bf16.mxu0 0
      %1152 = vmatmul.mubr.bf16.gmra.mrb[0].mxu0 %v621
      %v1153 = vpop.f32.mrb[0].mxu0
      %v1154 = vadd.f32 0.0, %v1153
      %v1155 = vpop.f32.mrb[0].mxu0
      %v1156 = vpop.f32.mrb[0].mxu0
      %v1157 = vadd.f32 0.0, %v1156
      %v1158 = vpop.f32.mrb[0].mxu0
      %1159 = vmatprep.mubr.bf16.mxu0 0
      %1160 = vmatmul.mubr.bf16.gmra.mrb[0].mxu0 %v622
      %v1161 = vpop.f32.mrb[0].mxu0
      %v1162 = vadd.f32 0.0, %v1161
      %v1163 = vpop.f32.mrb[0].mxu0
      %v1164 = vpop.f32.mrb[0].mxu0
      %v1165 = vadd.f32 0.0, %v1164
      %v1166 = vpop.f32.mrb[0].mxu0
      %1167 = vmatprep.mubr.bf16.mxu0 0
      %1168 = vmatmul.mubr.bf16.gmra.mrb[0].mxu0 %v623
      %v1169 = vpop.f32.mrb[0].mxu0
      %v1170 = vadd.f32 0.0, %v1169
      %v1171 = vpop.f32.mrb[0].mxu0
      %v1172 = vpop.f32.mrb[0].mxu0
      %v1173 = vadd.f32 0.0, %v1172
      %v1174 = vpop.f32.mrb[0].mxu0
      %1175 = vmatprep.mubr.bf16.mxu0 0
      %1176 = vmatmul.mubr.bf16.gmra.mrb[0].mxu0 %v624
      %v1177 = vpop.f32.mrb[0].mxu0
      %v1178 = vadd.f32 0.0, %v1177
      %v1179 = vpop.f32.mrb[0].mxu0
      %v1180 = vpop.f32.mrb[0].mxu0
      %v1181 = vadd.f32 0.0, %v1180
      %v1182 = vpop.f32.mrb[0].mxu0
      %1183 = vmatprep.mubr.bf16.mxu0 0
      %1184 = vmatmul.mubr.bf16.gmra.mrb[0].mxu0 %v625
      %v1185 = vpop.f32.mrb[0].mxu0
      %v1186 = vadd.f32 0.0, %v1185
      %v1187 = vpop.f32.mrb[0].mxu0
      %v1188 = vpop.f32.mrb[0].mxu0
      %v1189 = vadd.f32 0.0, %v1188
      %v1190 = vpop.f32.mrb[0].mxu0
      %1191 = vmatprep.mubr.bf16.mxu0 0
      %1192 = vmatmul.mubr.bf16.gmra.mrb[0].mxu0 %v626
      %v1193 = vpop.f32.mrb[0].mxu0
      %v1194 = vadd.f32 0.0, %v1193
      %v1195 = vpop.f32.mrb[0].mxu0
      %v1196 = vpop.f32.mrb[0].mxu0
      %v1197 = vadd.f32 0.0, %v1196
      %v1198 = vpop.f32.mrb[0].mxu0
      %1199 = vmatprep.mubr.bf16.mxu0 0
      %1200 = vmatmul.mubr.bf16.gmra.mrb[0].mxu0 %v627
      %v1201 = vpop.f32.mrb[0].mxu0
      %v1202 = vadd.f32 0.0, %v1201
      %v1203 = vpop.f32.mrb[0].mxu0
      %v1204 = vpop.f32.mrb[0].mxu0
      %v1205 = vadd.f32 0.0, %v1204
      %v1206 = vpop.f32.mrb[0].mxu0
      %1207 = vmatprep.mubr.bf16.mxu0 0
      %1208 = vmatmul.mubr.bf16.gmra.mrb[0].mxu0 %v628
      %v1209 = vpop.f32.mrb[0].mxu0
      %v1210 = vadd.f32 0.0, %v1209
      %v1211 = vpop.f32.mrb[0].mxu0
      %v1212 = vpop.f32.mrb[0].mxu0
      %v1213 = vadd.f32 0.0, %v1212
      %v1214 = vpop.f32.mrb[0].mxu0
      %1215 = vmatprep.mubr.bf16.mxu0 0
      %1216 = vmatmul.mubr.bf16.gmra.mrb[0].mxu0 %v629
      %v1217 = vpop.f32.mrb[0].mxu0
      %v1218 = vadd.f32 0.0, %v1217
      %v1219 = vpop.f32.mrb[0].mxu0
      %v1220 = vpop.f32.mrb[0].mxu0
      %v1221 = vadd.f32 0.0, %v1220
      %v1222 = vpop.f32.mrb[0].mxu0
      %1223 = vmatprep.mubr.bf16.mxu0 0
      %1224 = vmatmul.mubr.bf16.gmra.mrb[0].mxu0 %v630
      %v1225 = vpop.f32.mrb[0].mxu0
      %v1226 = vadd.f32 0.0, %v1225
      %v1227 = vpop.f32.mrb[0].mxu0
      %v1228 = vpop.f32.mrb[0].mxu0
      %v1229 = vadd.f32 0.0, %v1228
      %v1230 = vpop.f32.mrb[0].mxu0
      %1231 = vmatprep.mubr.bf16.mxu0 0
      %1232 = vmatmul.mubr.bf16.gmra.mrb[0].mxu0 %v631
      %v1233 = vpop.f32.mrb[0].mxu0
      %v1234 = vadd.f32 0.0, %v1233
      %v1235 = vpop.f32.mrb[0].mxu0
      %v1236 = vpop.f32.mrb[0].mxu0
      %v1237 = vadd.f32 0.0, %v1236
      %v1238 = vpop.f32.mrb[0].mxu0
      %1239 = vmatprep.mubr.bf16.mxu0 0
      %1240 = vmatmul.mubr.bf16.gmra.mrb[0].mxu0 %v632
      %v1241 = vpop.f32.mrb[0].mxu0
      %v1242 = vadd.f32 0.0, %v1241
      %v1243 = vpop.f32.mrb[0].mxu0
      %v1244 = vpop.f32.mrb[0].mxu0
      %v1245 = vadd.f32 0.0, %v1244
      %v1246 = vpop.f32.mrb[0].mxu0
      %1247 = vmatprep.mubr.bf16.mxu0 0
      %1248 = vmatmul.mubr.bf16.gmra.mrb[0].mxu0 %v633
      %v1249 = vpop.f32.mrb[0].mxu0
      %v1250 = vadd.f32 0.0, %v1249
      %v1251 = vpop.f32.mrb[0].mxu0
      %v1252 = vpop.f32.mrb[0].mxu0
      %v1253 = vadd.f32 0.0, %v1252
      %v1254 = vpop.f32.mrb[0].mxu0
      %1255 = vmatprep.mubr.bf16.mxu0 0
      %1256 = vmatmul.mubr.bf16.gmra.mrb[0].mxu0 %v634
      %v1257 = vpop.f32.mrb[0].mxu0
      %v1258 = vadd.f32 0.0, %v1257
      %v1259 = vpop.f32.mrb[0].mxu0
      %v1260 = vpop.f32.mrb[0].mxu0
      %v1261 = vadd.f32 0.0, %v1260
      %v1262 = vpop.f32.mrb[0].mxu0
      %1263 = vmatprep.mubr.bf16.mxu0 0
      %1264 = vmatmul.mubr.bf16.gmra.mrb[0].mxu0 %v635
      %v1265 = vpop.f32.mrb[0].mxu0
      %v1266 = vadd.f32 0.0, %v1265
      %v1267 = vpop.f32.mrb[0].mxu0
      %v1268 = vpop.f32.mrb[0].mxu0
      %v1269 = vadd.f32 0.0, %v1268
      %v1270 = vpop.f32.mrb[0].mxu0
      %1271 = vmatprep.mubr.bf16.mxu0 0
      %1272 = vmatmul.mubr.bf16.gmra.mrb[0].mxu0 %v636
      %v1273 = vpop.f32.mrb[0].mxu0
      %v1274 = vadd.f32 0.0, %v1273
      %v1275 = vpop.f32.mrb[0].mxu0
      %v1276 = vpop.f32.mrb[0].mxu0
      %v1277 = vadd.f32 0.0, %v1276
      %v1278 = vpop.f32.mrb[0].mxu0
      %1279 = vmatprep.mubr.bf16.mxu0 0
      %1280 = vmatmul.mubr.bf16.gmra.mrb[0].mxu0 %v637
      %v1281 = vpop.f32.mrb[0].mxu0
      %v1282 = vadd.f32 0.0, %v1281
      %v1283 = vpop.f32.mrb[0].mxu0
      %v1284 = vpop.f32.mrb[0].mxu0
      %v1285 = vadd.f32 0.0, %v1284
      %v1286 = vpop.f32.mrb[0].mxu0
      %1287 = vmatprep.mubr.bf16.mxu0 0
      %1288 = vmatmul.mubr.bf16.gmra.mrb[0].mxu0 %v638
      %v1289 = vpop.f32.mrb[0].mxu0
      %v1290 = vadd.f32 0.0, %v1289
      %v1291 = vpop.f32.mrb[0].mxu0
      %v1292 = vpop.f32.mrb[0].mxu0
      %v1293 = vadd.f32 0.0, %v1292
      %v1294 = vpop.f32.mrb[0].mxu0
      %1295 = vdwg.mxu0
      %v1296 = vmax.f32 %v786, %v914
      %v1297 = vmax.f32 %v789, %v917
      %v1298 = vmax.f32 %v794, %v922
      %v1299 = vmax.f32 %v797, %v925
      %v1300 = vmax.f32 %v802, %v930
      %v1301 = vmax.f32 %v805, %v933
      %v1302 = vmax.f32 %v810, %v938
      %v1303 = vmax.f32 %v813, %v941
      %v1304 = vmax.f32 %v818, %v946
      %v1305 = vmax.f32 %v821, %v949
      %v1306 = vmax.f32 %v826, %v954
      %v1307 = vmax.f32 %v829, %v957
      %v1308 = vmax.f32 %v834, %v962
      %v1309 = vmax.f32 %v837, %v965
      %v1310 = vmax.f32 %v842, %v970
      %v1311 = vmax.f32 %v845, %v973
      %v1312 = vmax.f32 %v850, %v978
      %v1313 = vmax.f32 %v853, %v981
      %v1314 = vmax.f32 %v858, %v986
      %v1315 = vmax.f32 %v861, %v989
      %v1316 = vmax.f32 %v866, %v994
      %v1317 = vmax.f32 %v869, %v997
      %v1318 = vmax.f32 %v874, %v1002
      %v1319 = vmax.f32 %v877, %v1005
      %v1320 = vmax.f32 %v882, %v1010
      %v1321 = vmax.f32 %v885, %v1013
      %v1322 = vmax.f32 %v890, %v1018
      %v1323 = vmax.f32 %v893, %v1021
      %v1324 = vmax.f32 %v898, %v1026
      %v1325 = vmax.f32 %v901, %v1029
      %v1326 = vmax.f32 %v906, %v1034
      %v1327 = vmax.f32 %v909, %v1037
      %v1328 = vmax.f32 %v1042, %v1170
      %v1329 = vmax.f32 %v1045, %v1173
      %v1330 = vmax.f32 %v1050, %v1178
      %v1331 = vmax.f32 %v1053, %v1181
      %v1332 = vmax.f32 %v1058, %v1186
      %v1333 = vmax.f32 %v1061, %v1189
      %v1334 = vmax.f32 %v1066, %v1194
      %v1335 = vmax.f32 %v1069, %v1197
      %v1336 = vmax.f32 %v1074, %v1202
      %v1337 = vmax.f32 %v1077, %v1205
      %v1338 = vmax.f32 %v1082, %v1210
      %v1339 = vmax.f32 %v1085, %v1213
      %v1340 = vmax.f32 %v1090, %v1218
      %v1341 = vmax.f32 %v1093, %v1221
      %v1342 = vmax.f32 %v1098, %v1226
      %v1343 = vmax.f32 %v1101, %v1229
      %v1344 = vmax.f32 %v1106, %v1234
      %v1345 = vmax.f32 %v1109, %v1237
      %v1346 = vmax.f32 %v1114, %v1242
      %v1347 = vmax.f32 %v1117, %v1245
      %v1348 = vmax.f32 %v1122, %v1250
      %v1349 = vmax.f32 %v1125, %v1253
      %v1350 = vmax.f32 %v1130, %v1258
      %v1351 = vmax.f32 %v1133, %v1261
      %v1352 = vmax.f32 %v1138, %v1266
      %v1353 = vmax.f32 %v1141, %v1269
      %v1354 = vmax.f32 %v1146, %v1274
      %v1355 = vmax.f32 %v1149, %v1277
      %v1356 = vmax.f32 %v1154, %v1282
      %v1357 = vmax.f32 %v1157, %v1285
      %v1358 = vmax.f32 %v1162, %v1290
      %v1359 = vmax.f32 %v1165, %v1293
      %v1360 = vmax.f32 %v1296, %v1328
      %v1361 = vmax.f32 %v1297, %v1329
      %v1362 = vmax.f32 %v1298, %v1330
      %v1363 = vmax.f32 %v1299, %v1331
      %v1364 = vmax.f32 %v1300, %v1332
      %v1365 = vmax.f32 %v1301, %v1333
      %v1366 = vmax.f32 %v1302, %v1334
      %v1367 = vmax.f32 %v1303, %v1335
      %v1368 = vmax.f32 %v1304, %v1336
      %v1369 = vmax.f32 %v1305, %v1337
      %v1370 = vmax.f32 %v1306, %v1338
      %v1371 = vmax.f32 %v1307, %v1339
      %v1372 = vmax.f32 %v1308, %v1340
      %v1373 = vmax.f32 %v1309, %v1341
      %v1374 = vmax.f32 %v1310, %v1342
      %v1375 = vmax.f32 %v1311, %v1343
      %v1376 = vmax.f32 %v1312, %v1344
      %v1377 = vmax.f32 %v1313, %v1345
      %v1378 = vmax.f32 %v1314, %v1346
      %v1379 = vmax.f32 %v1315, %v1347
      %v1380 = vmax.f32 %v1316, %v1348
      %v1381 = vmax.f32 %v1317, %v1349
      %v1382 = vmax.f32 %v1318, %v1350
      %v1383 = vmax.f32 %v1319, %v1351
      %v1384 = vmax.f32 %v1320, %v1352
      %v1385 = vmax.f32 %v1321, %v1353
      %v1386 = vmax.f32 %v1322, %v1354
      %v1387 = vmax.f32 %v1323, %v1355
      %v1388 = vmax.f32 %v1324, %v1356
      %v1389 = vmax.f32 %v1325, %v1357
      %v1390 = vmax.f32 %v1326, %v1358
      %v1391 = vmax.f32 %v1327, %v1359
      %v1392 = vld [vmem:[%s2] sm:$0x1]
      %v1394 = vlaneseq
      %v1395 = vshrl.u32 %v1394, 7
      %v1396 = vsub.s32 0, %v1395
      %v1397 = vrot.slane %v1392, %v1396
      %v1399 = vadd.f32 %v1360, %v1397
      %v1400 = vadd.f32 %v1361, %v1397
      %v1401 = vadd.f32 %v1362, %v1397
      %v1402 = vadd.f32 %v1363, %v1397
      %v1403 = vadd.f32 %v1364, %v1397
      %v1404 = vadd.f32 %v1365, %v1397
      %v1405 = vadd.f32 %v1366, %v1397
      %v1406 = vadd.f32 %v1367, %v1397
      %v1407 = vadd.f32 %v1368, %v1397
      %v1408 = vadd.f32 %v1369, %v1397
      %v1409 = vadd.f32 %v1370, %v1397
      %v1410 = vadd.f32 %v1371, %v1397
      %v1411 = vadd.f32 %v1372, %v1397
      %v1412 = vadd.f32 %v1373, %v1397
      %v1413 = vadd.f32 %v1374, %v1397
      %v1414 = vadd.f32 %v1375, %v1397
      %v1415 = vadd.f32 %v1376, %v1397
      %v1416 = vadd.f32 %v1377, %v1397
      %v1417 = vadd.f32 %v1378, %v1397
      %v1418 = vadd.f32 %v1379, %v1397
      %v1419 = vadd.f32 %v1380, %v1397
      %v1420 = vadd.f32 %v1381, %v1397
      %v1421 = vadd.f32 %v1382, %v1397
      %v1422 = vadd.f32 %v1383, %v1397
      %v1423 = vadd.f32 %v1384, %v1397
      %v1424 = vadd.f32 %v1385, %v1397
      %v1425 = vadd.f32 %v1386, %v1397
      %v1426 = vadd.f32 %v1387, %v1397
      %v1427 = vadd.f32 %v1388, %v1397
      %v1428 = vadd.f32 %v1389, %v1397
      %v1429 = vadd.f32 %v1390, %v1397
      %v1430 = vadd.f32 %v1391, %v1397
      %v1431 = vmax.f32 %v1399, 0.0
      %v1432 = vmax.f32 %v1400, 0.0
      %v1433 = vmax.f32 %v1401, 0.0
      %v1434 = vmax.f32 %v1402, 0.0
      %v1435 = vmax.f32 %v1403, 0.0
      %v1436 = vmax.f32 %v1404, 0.0
      %v1437 = vmax.f32 %v1405, 0.0
      %v1438 = vmax.f32 %v1406, 0.0
      %v1439 = vmax.f32 %v1407, 0.0
      %v1440 = vmax.f32 %v1408, 0.0
      %v1441 = vmax.f32 %v1409, 0.0
      %v1442 = vmax.f32 %v1410, 0.0
      %v1443 = vmax.f32 %v1411, 0.0
      %v1444 = vmax.f32 %v1412, 0.0
      %v1445 = vmax.f32 %v1413, 0.0
      %v1446 = vmax.f32 %v1414, 0.0
      %v1447 = vmax.f32 %v1415, 0.0
      %v1448 = vmax.f32 %v1416, 0.0
      %v1449 = vmax.f32 %v1417, 0.0
      %v1450 = vmax.f32 %v1418, 0.0
      %v1451 = vmax.f32 %v1419, 0.0
      %v1452 = vmax.f32 %v1420, 0.0
      %v1453 = vmax.f32 %v1421, 0.0
      %v1454 = vmax.f32 %v1422, 0.0
      %v1455 = vmax.f32 %v1423, 0.0
      %v1456 = vmax.f32 %v1424, 0.0
      %v1457 = vmax.f32 %v1425, 0.0
      %v1458 = vmax.f32 %v1426, 0.0
      %v1459 = vmax.f32 %v1427, 0.0
      %v1460 = vmax.f32 %v1428, 0.0
      %v1461 = vmax.f32 %v1429, 0.0
      %v1462 = vmax.f32 %v1430, 0.0
      %v1463 = vpack.c.bf16 %v1432, %v1431
      %v1464 = vpack.c.bf16 %v1434, %v1433
      %v1465 = vpack.c.bf16 %v1436, %v1435
      %v1466 = vpack.c.bf16 %v1438, %v1437
      %v1467 = vpack.c.bf16 %v1440, %v1439
      %v1468 = vpack.c.bf16 %v1442, %v1441
      %v1469 = vpack.c.bf16 %v1444, %v1443
      %v1470 = vpack.c.bf16 %v1446, %v1445
      %v1471 = vpack.c.bf16 %v1448, %v1447
      %v1472 = vpack.c.bf16 %v1450, %v1449
      %v1473 = vpack.c.bf16 %v1452, %v1451
      %v1474 = vpack.c.bf16 %v1454, %v1453
      %v1475 = vpack.c.bf16 %v1456, %v1455
      %v1476 = vpack.c.bf16 %v1458, %v1457
      %v1477 = vpack.c.bf16 %v1460, %v1459
      %v1478 = vpack.c.bf16 %v1462, %v1461
      %v1495 = vunpack.c.l.b16 %v1463
      %v1496 = vunpack.c.h.b16 %v1463
      %v1497 = vunpack.c.l.b16 %v1464
      %v1498 = vunpack.c.h.b16 %v1464
      %v1499 = vunpack.c.l.b16 %v1465
      %v1500 = vunpack.c.h.b16 %v1465
      %v1501 = vunpack.c.l.b16 %v1466
      %v1502 = vunpack.c.h.b16 %v1466
      %v1503 = vunpack.c.l.b16 %v1467
      %v1504 = vunpack.c.h.b16 %v1467
      %v1505 = vunpack.c.l.b16 %v1468
      %v1506 = vunpack.c.h.b16 %v1468
      %v1507 = vunpack.c.l.b16 %v1469
      %v1508 = vunpack.c.h.b16 %v1469
      %v1509 = vunpack.c.l.b16 %v1470
      %v1510 = vunpack.c.h.b16 %v1470
      %v1511 = vunpack.c.l.b16 %v1471
      %v1512 = vunpack.c.h.b16 %v1471
      %v1513 = vunpack.c.l.b16 %v1472
      %v1514 = vunpack.c.h.b16 %v1472
      %v1515 = vunpack.c.l.b16 %v1473
      %v1516 = vunpack.c.h.b16 %v1473
      %v1517 = vunpack.c.l.b16 %v1474
      %v1518 = vunpack.c.h.b16 %v1474
      %v1519 = vunpack.c.l.b16 %v1475
      %v1520 = vunpack.c.h.b16 %v1475
      %v1521 = vunpack.c.l.b16 %v1476
      %v1522 = vunpack.c.h.b16 %v1476
      %v1523 = vunpack.c.l.b16 %v1477
      %v1524 = vunpack.c.h.b16 %v1477
      %v1525 = vunpack.c.l.b16 %v1478
      %v1526 = vunpack.c.h.b16 %v1478
      %v1527 = vpack.c.b16 %v1495, %v1495
      %v1528 = vpack.c.b16 %v1496, %v1496
      %v1529 = vpack.c.b16 %v1497, %v1497
      %v1530 = vpack.c.b16 %v1498, %v1498
      %v1531 = vpack.c.b16 %v1499, %v1499
      %v1532 = vpack.c.b16 %v1500, %v1500
      %v1533 = vpack.c.b16 %v1501, %v1501
      %v1534 = vpack.c.b16 %v1502, %v1502
      %v1535 = vpack.c.b16 %v1503, %v1503
      %v1536 = vpack.c.b16 %v1504, %v1504
      %v1537 = vpack.c.b16 %v1505, %v1505
      %v1538 = vpack.c.b16 %v1506, %v1506
      %v1539 = vpack.c.b16 %v1507, %v1507
      %v1540 = vpack.c.b16 %v1508, %v1508
      %v1541 = vpack.c.b16 %v1509, %v1509
      %v1542 = vpack.c.b16 %v1510, %v1510
      %v1543 = vpack.c.b16 %v1511, %v1511
      %v1544 = vpack.c.b16 %v1512, %v1512
      %v1545 = vpack.c.b16 %v1513, %v1513
      %v1546 = vpack.c.b16 %v1514, %v1514
      %v1547 = vpack.c.b16 %v1515, %v1515
      %v1548 = vpack.c.b16 %v1516, %v1516
      %v1549 = vpack.c.b16 %v1517, %v1517
      %v1550 = vpack.c.b16 %v1518, %v1518
      %v1551 = vpack.c.b16 %v1519, %v1519
      %v1552 = vpack.c.b16 %v1520, %v1520
      %v1553 = vpack.c.b16 %v1521, %v1521
      %v1554 = vpack.c.b16 %v1522, %v1522
      %v1555 = vpack.c.b16 %v1523, %v1523
      %v1556 = vpack.c.b16 %v1524, %v1524
      %v1557 = vpack.c.b16 %v1525, %v1525
      %v1558 = vpack.c.b16 %v1526, %v1526
      %1591 = vst [vmem:[%s172] sm:$0xf] %v1527
      %1592 = vst [vmem:[%s172 + $0x4] sm:$0xf] %v1528
      %1593 = vst [vmem:[%s172 + $0x8] sm:$0xf] %v1529
      %1594 = vst [vmem:[%s172 + $0xc] sm:$0xf] %v1530
      %1595 = vst [vmem:[%s172 + $0x10] sm:$0xf] %v1531
      %1596 = vst [vmem:[%s172 + $0x14] sm:$0xf] %v1532
      %1597 = vst [vmem:[%s172 + $0x18] sm:$0xf] %v1533
      %1598 = vst [vmem:[%s172 + $0x1c] sm:$0xf] %v1534
      %1599 = vst [vmem:[%s172 + $0x20] sm:$0xf] %v1535
      %1600 = vst [vmem:[%s172 + $0x24] sm:$0xf] %v1536
      %1601 = vst [vmem:[%s172 + $0x28] sm:$0xf] %v1537
      %1602 = vst [vmem:[%s172 + $0x2c] sm:$0xf] %v1538
      %1603 = vst [vmem:[%s172 + $0x30] sm:$0xf] %v1539
      %1604 = vst [vmem:[%s172 + $0x34] sm:$0xf] %v1540
      %1605 = vst [vmem:[%s172 + $0x38] sm:$0xf] %v1541
      %1606 = vst [vmem:[%s172 + $0x3c] sm:$0xf] %v1542
      %1607 = vst [vmem:[%s172 + $0x40] sm:$0xf] %v1543
      %1608 = vst [vmem:[%s172 + $0x44] sm:$0xf] %v1544
      %1609 = vst [vmem:[%s172 + $0x48] sm:$0xf] %v1545
      %1610 = vst [vmem:[%s172 + $0x4c] sm:$0xf] %v1546
      %1611 = vst [vmem:[%s172 + $0x50] sm:$0xf] %v1547
      %1612 = vst [vmem:[%s172 + $0x54] sm:$0xf] %v1548
      %1613 = vst [vmem:[%s172 + $0x58] sm:$0xf] %v1549
      %1614 = vst [vmem:[%s172 + $0x5c] sm:$0xf] %v1550
      %1615 = vst [vmem:[%s172 + $0x60] sm:$0xf] %v1551
      %1616 = vst [vmem:[%s172 + $0x64] sm:$0xf] %v1552
      %1617 = vst [vmem:[%s172 + $0x68] sm:$0xf] %v1553
      %1618 = vst [vmem:[%s172 + $0x6c] sm:$0xf] %v1554
      %1619 = vst [vmem:[%s172 + $0x70] sm:$0xf] %v1555
      %1620 = vst [vmem:[%s172 + $0x74] sm:$0xf] %v1556
      %1621 = vst [vmem:[%s172 + $0x78] sm:$0xf] %v1557
      %1622 = vst [vmem:[%s172 + $0x7c] sm:$0xf] %v1558
      %s1623 = smul.u32 32, %s14
      %p1624 = scmp.lt.s32.totalorder %s1623, 63
      %s1625 = scalar_select %p1624, %s1623, 63
      %s1626 = smul.addr %s1625, 4
      %s1627 = scalar_lea.vmem %s3, %s1626
      // Predicated region
      $region33: #{net_forward.3} parent=31 // pred_check
        %p1628 = pneg %p100
      $region34: #{net_forward.3} parent=31 // pred_check_branch
        %1630 = sbr.rel (%p1628) target = $region36
      $region35: #{net_forward.3} parent=31 // pred_region
        %s1631 = smul.u32 32, %s14
      $region36: #{net_forward.3} parent=31 // pred_fallthru
        _
    $region32: #{net_forward.3} parent=5 // pred_fallthru
      _
    %p1632 = scmp.le.s32.totalorder 2, %s9
    // Predicated region
    $region37: #{net_forward.3} parent=5 // pred_check
      %p1633 = pneg %p1632
    $region38: #{net_forward.3} parent=5 // pred_check_branch
      %1635 = sbr.rel (%p1633) target = $region40
    $region39: #{net_forward.3} parent=5 // pred_region
      %s1636 = ssub.s32 %s9, 2
      // Predicated region
      $region41: #{net_forward.3} parent=39 // pred_check
        %p1637 = pneg %p106
      $region42: #{net_forward.3} parent=39 // pred_check_branch
        %1639 = sbr.rel (%p1637) target = $region44
      $region43: #{net_forward.3} parent=39 // pred_region
        %s1640 = smul.u32 32, %s15
        %p1641 = scmp.lt.s32.totalorder %s1640, 63
        %s1642 = scalar_select %p1641, %s1640, 63
        %s1643 = smul.addr %s1642, 4
        %s1644 = scalar_lea.vmem %s3, %s1643
      $region44: #{net_forward.3} parent=39 // pred_fallthru
        _
    $region40: #{net_forward.3} parent=5 // pred_fallthru
      _
  $region6: #{net_forward.3} parent=0 // loop_footer
    %s13 = sadd.s32 1, %s9
  $region7: #{net_forward.3} parent=0 // loop_footer_branch
    %8 = sbr.rel target = $region3
  $region8: #{net_forward.3} parent=0 // loop_exit
    _

// kernel: net_forward.4
$region0: #{net_forward.4}
  #allocation0 [shape = 'u32[]', space=smem, size = 0x4, offset = 0x4, fixed_abs, tag = 'smem constant byte address 0x4 - core index']
  #allocation1 [shape = 'u32[144,128]{1,0:T(1,128)}', space=vmem, size = 0x12000, scoped, tag = 'internal scratch']
  %s0 = inlined_call_operand.vmem [shape: bf16[256,256], index: 0, kind: input, shape index: {}]
  %s1 = inlined_call_operand.vmem [shape: bf16[256,128], index: 1, kind: input, shape index: {}]
  %s2 = inlined_call_operand.vmem [shape: f32[1,128], index: 2, kind: input, shape index: {}]
  %s3 = inlined_call_operand.vmem [shape: bf16[64,128], index: 3, kind: output, shape index: {}]
  %s4 = sld [smem:[#allocation0]]
  $region22: #{net_forward.4} parent=0
    _
  %s6 = ssub.s32 1, %s4
  %s7 = scalar_select 0, %s6, %s4
  // Predicated region
  $region2: #{net_forward.4} parent=0 // pred_check
    _
  $region3: #{net_forward.4} parent=0 // pred_check_branch
    %9 = sbr.rel (0) target = $region5
  $region4: #{net_forward.4} parent=0 // pred_region
    _
  $region5: #{net_forward.4} parent=0 // pred_fallthru
    _
  // Predicated region
  $region6: #{net_forward.4} parent=0 // pred_check
    _
  $region7: #{net_forward.4} parent=0 // pred_check_branch
    %11 = sbr.rel (0) target = $region9
  $region8: #{net_forward.4} parent=0 // pred_region
    _
  $region9: #{net_forward.4} parent=0 // pred_fallthru
    _
  // Predicated region
  $region10: #{net_forward.4} parent=0 // pred_check
    _
  $region11: #{net_forward.4} parent=0 // pred_check_branch
    %13 = sbr.rel (0) target = $region13
  $region12: #{net_forward.4} parent=0 // pred_region
    _
  $region13: #{net_forward.4} parent=0 // pred_fallthru
    _
  %v15 = vld [vmem:[%s0] sm:$0xff]
  %v16 = vld [vmem:[%s0 + $0x8] sm:$0xff]
  %v17 = vld [vmem:[%s0 + $0x10] sm:$0xff]
  %v18 = vld [vmem:[%s0 + $0x18] sm:$0xff]
  %v19 = vld [vmem:[%s0 + $0x20] sm:$0xff]
  %v20 = vld [vmem:[%s0 + $0x28] sm:$0xff]
  %v21 = vld [vmem:[%s0 + $0x30] sm:$0xff]
  %v22 = vld [vmem:[%s0 + $0x38] sm:$0xff]
  %v23 = vld [vmem:[%s0 + $0x40] sm:$0xff]
  %v24 = vld [vmem:[%s0 + $0x48] sm:$0xff]
  %v25 = vld [vmem:[%s0 + $0x50] sm:$0xff]
  %v26 = vld [vmem:[%s0 + $0x58] sm:$0xff]
  %v27 = vld [vmem:[%s0 + $0x60] sm:$0xff]
  %v28 = vld [vmem:[%s0 + $0x68] sm:$0xff]
  %v29 = vld [vmem:[%s0 + $0x70] sm:$0xff]
  %v30 = vld [vmem:[%s0 + $0x78] sm:$0xff]
  %v31 = vld [vmem:[%s0 + $0x80] sm:$0xff]
  %v32 = vld [vmem:[%s0 + $0x88] sm:$0xff]
  %v33 = vld [vmem:[%s0 + $0x90] sm:$0xff]
  %v34 = vld [vmem:[%s0 + $0x98] sm:$0xff]
  %v35 = vld [vmem:[%s0 + $0xa0] sm:$0xff]
  %v36 = vld [vmem:[%s0 + $0xa8] sm:$0xff]
  %v37 = vld [vmem:[%s0 + $0xb0] sm:$0xff]
  %v38 = vld [vmem:[%s0 + $0xb8] sm:$0xff]
  %v39 = vld [vmem:[%s0 + $0xc0] sm:$0xff]
  %v40 = vld [vmem:[%s0 + $0xc8] sm:$0xff]
  %v41 = vld [vmem:[%s0 + $0xd0] sm:$0xff]
  %v42 = vld [vmem:[%s0 + $0xd8] sm:$0xff]
  %v43 = vld [vmem:[%s0 + $0xe0] sm:$0xff]
  %v44 = vld [vmem:[%s0 + $0xe8] sm:$0xff]
  %v45 = vld [vmem:[%s0 + $0xf0] sm:$0xff]
  %v46 = vld [vmem:[%s0 + $0xf8] sm:$0xff]
  %v47 = vld [vmem:[%s1] sm:$0xf]
  %v48 = vld [vmem:[%s1 + $0x4] sm:$0xf]
  %v49 = vld [vmem:[%s1 + $0x8] sm:$0xf]
  %v50 = vld [vmem:[%s1 + $0xc] sm:$0xf]
  %v51 = vld [vmem:[%s1 + $0x10] sm:$0xf]
  %v52 = vld [vmem:[%s1 + $0x14] sm:$0xf]
  %v53 = vld [vmem:[%s1 + $0x18] sm:$0xf]
  %v54 = vld [vmem:[%s1 + $0x1c] sm:$0xf]
  %v55 = vld [vmem:[%s1 + $0x20] sm:$0xf]
  %v56 = vld [vmem:[%s1 + $0x24] sm:$0xf]
  %v57 = vld [vmem:[%s1 + $0x28] sm:$0xf]
  %v58 = vld [vmem:[%s1 + $0x2c] sm:$0xf]
  %v59 = vld [vmem:[%s1 + $0x30] sm:$0xf]
  %v60 = vld [vmem:[%s1 + $0x34] sm:$0xf]
  %v61 = vld [vmem:[%s1 + $0x38] sm:$0xf]
  %v62 = vld [vmem:[%s1 + $0x3c] sm:$0xf]
  %v63 = vld [vmem:[%s1 + $0x40] sm:$0xf]
  %v64 = vld [vmem:[%s1 + $0x44] sm:$0xf]
  %v65 = vld [vmem:[%s1 + $0x48] sm:$0xf]
  %v66 = vld [vmem:[%s1 + $0x4c] sm:$0xf]
  %v67 = vld [vmem:[%s1 + $0x50] sm:$0xf]
  %v68 = vld [vmem:[%s1 + $0x54] sm:$0xf]
  %v69 = vld [vmem:[%s1 + $0x58] sm:$0xf]
  %v70 = vld [vmem:[%s1 + $0x5c] sm:$0xf]
  %v71 = vld [vmem:[%s1 + $0x60] sm:$0xf]
  %v72 = vld [vmem:[%s1 + $0x64] sm:$0xf]
  %v73 = vld [vmem:[%s1 + $0x68] sm:$0xf]
  %v74 = vld [vmem:[%s1 + $0x6c] sm:$0xf]
  %v75 = vld [vmem:[%s1 + $0x70] sm:$0xf]
  %v76 = vld [vmem:[%s1 + $0x74] sm:$0xf]
  %v77 = vld [vmem:[%s1 + $0x78] sm:$0xf]
  %v78 = vld [vmem:[%s1 + $0x7c] sm:$0xf]
  %v111 = vunpack.c.l.b16 %v15
  %v112 = vunpack.c.h.b16 %v15
  %v113 = vunpack.c.l.b16 %v16
  %v114 = vunpack.c.h.b16 %v16
  %v115 = vunpack.c.l.b16 %v17
  %v116 = vunpack.c.h.b16 %v17
  %v117 = vunpack.c.l.b16 %v18
  %v118 = vunpack.c.h.b16 %v18
  %v119 = vunpack.c.l.b16 %v19
  %v120 = vunpack.c.h.b16 %v19
  %v121 = vunpack.c.l.b16 %v20
  %v122 = vunpack.c.h.b16 %v20
  %v123 = vunpack.c.l.b16 %v21
  %v124 = vunpack.c.h.b16 %v21
  %v125 = vunpack.c.l.b16 %v22
  %v126 = vunpack.c.h.b16 %v22
  %v127 = vunpack.c.l.b16 %v23
  %v128 = vunpack.c.h.b16 %v23
  %v129 = vunpack.c.l.b16 %v24
  %v130 = vunpack.c.h.b16 %v24
  %v131 = vunpack.c.l.b16 %v25
  %v132 = vunpack.c.h.b16 %v25
  %v133 = vunpack.c.l.b16 %v26
  %v134 = vunpack.c.h.b16 %v26
  %v135 = vunpack.c.l.b16 %v27
  %v136 = vunpack.c.h.b16 %v27
  %v137 = vunpack.c.l.b16 %v28
  %v138 = vunpack.c.h.b16 %v28
  %v139 = vunpack.c.l.b16 %v29
  %v140 = vunpack.c.h.b16 %v29
  %v141 = vunpack.c.l.b16 %v30
  %v142 = vunpack.c.h.b16 %v30
  %v143 = vunpack.c.l.b16 %v31
  %v144 = vunpack.c.h.b16 %v31
  %v145 = vunpack.c.l.b16 %v32
  %v146 = vunpack.c.h.b16 %v32
  %v147 = vunpack.c.l.b16 %v33
  %v148 = vunpack.c.h.b16 %v33
  %v149 = vunpack.c.l.b16 %v34
  %v150 = vunpack.c.h.b16 %v34
  %v151 = vunpack.c.l.b16 %v35
  %v152 = vunpack.c.h.b16 %v35
  %v153 = vunpack.c.l.b16 %v36
  %v154 = vunpack.c.h.b16 %v36
  %v155 = vunpack.c.l.b16 %v37
  %v156 = vunpack.c.h.b16 %v37
  %v157 = vunpack.c.l.b16 %v38
  %v158 = vunpack.c.h.b16 %v38
  %v159 = vunpack.c.l.b16 %v39
  %v160 = vunpack.c.h.b16 %v39
  %v161 = vunpack.c.l.b16 %v40
  %v162 = vunpack.c.h.b16 %v40
  %v163 = vunpack.c.l.b16 %v41
  %v164 = vunpack.c.h.b16 %v41
  %v165 = vunpack.c.l.b16 %v42
  %v166 = vunpack.c.h.b16 %v42
  %v167 = vunpack.c.l.b16 %v43
  %v168 = vunpack.c.h.b16 %v43
  %v169 = vunpack.c.l.b16 %v44
  %v170 = vunpack.c.h.b16 %v44
  %v171 = vunpack.c.l.b16 %v45
  %v172 = vunpack.c.h.b16 %v45
  %v173 = vunpack.c.l.b16 %v46
  %v174 = vunpack.c.h.b16 %v46
  %v175 = vpack.c.b16 %v113, %v111
  %v176 = vpack.c.b16 %v114, %v112
  %v177 = vpack.c.b16 %v117, %v115
  %v178 = vpack.c.b16 %v118, %v116
  %v179 = vpack.c.b16 %v121, %v119
  %v180 = vpack.c.b16 %v122, %v120
  %v181 = vpack.c.b16 %v125, %v123
  %v182 = vpack.c.b16 %v126, %v124
  %v183 = vpack.c.b16 %v129, %v127
  %v184 = vpack.c.b16 %v130, %v128
  %v185 = vpack.c.b16 %v133, %v131
  %v186 = vpack.c.b16 %v134, %v132
  %v187 = vpack.c.b16 %v137, %v135
  %v188 = vpack.c.b16 %v138, %v136
  %v189 = vpack.c.b16 %v141, %v139
  %v190 = vpack.c.b16 %v142, %v140
  %v191 = vpack.c.b16 %v145, %v143
  %v192 = vpack.c.b16 %v146, %v144
  %v193 = vpack.c.b16 %v149, %v147
  %v194 = vpack.c.b16 %v150, %v148
  %v195 = vpack.c.b16 %v153, %v151
  %v196 = vpack.c.b16 %v154, %v152
  %v197 = vpack.c.b16 %v157, %v155
  %v198 = vpack.c.b16 %v158, %v156
  %v199 = vpack.c.b16 %v161, %v159
  %v200 = vpack.c.b16 %v162, %v160
  %v201 = vpack.c.b16 %v165, %v163
  %v202 = vpack.c.b16 %v166, %v164
  %v203 = vpack.c.b16 %v169, %v167
  %v204 = vpack.c.b16 %v170, %v168
  %v205 = vpack.c.b16 %v173, %v171
  %v206 = vpack.c.b16 %v174, %v172
  %v271 = vunpack.c.l.b16 %v47
  %v272 = vunpack.c.l.b16 %v48
  %v273 = vunpack.c.l.b16 %v49
  %v274 = vunpack.c.l.b16 %v50
  %v275 = vunpack.c.l.b16 %v51
  %v276 = vunpack.c.l.b16 %v52
  %v277 = vunpack.c.l.b16 %v53
  %v278 = vunpack.c.l.b16 %v54
  %v279 = vunpack.c.l.b16 %v55
  %v280 = vunpack.c.l.b16 %v56
  %v281 = vunpack.c.l.b16 %v57
  %v282 = vunpack.c.l.b16 %v58
  %v283 = vunpack.c.l.b16 %v59
  %v284 = vunpack.c.l.b16 %v60
  %v285 = vunpack.c.l.b16 %v61
  %v286 = vunpack.c.l.b16 %v62
  %v287 = vunpack.c.l.b16 %v63
  %v288 = vunpack.c.l.b16 %v64
  %v289 = vunpack.c.l.b16 %v65
  %v290 = vunpack.c.l.b16 %v66
  %v291 = vunpack.c.l.b16 %v67
  %v292 = vunpack.c.l.b16 %v68
  %v293 = vunpack.c.l.b16 %v69
  %v294 = vunpack.c.l.b16 %v70
  %v295 = vunpack.c.l.b16 %v71
  %v296 = vunpack.c.l.b16 %v72
  %v297 = vunpack.c.l.b16 %v73
  %v298 = vunpack.c.l.b16 %v74
  %v299 = vunpack.c.l.b16 %v75
  %v300 = vunpack.c.l.b16 %v76
  %v301 = vunpack.c.l.b16 %v77
  %v302 = vunpack.c.l.b16 %v78
  %v303 = vpack.c.b16 %v272, %v271
  %v304 = vpack.c.b16 %v274, %v273
  %v305 = vpack.c.b16 %v276, %v275
  %v306 = vpack.c.b16 %v278, %v277
  %v307 = vpack.c.b16 %v280, %v279
  %v308 = vpack.c.b16 %v282, %v281
  %v309 = vpack.c.b16 %v284, %v283
  %v310 = vpack.c.b16 %v286, %v285
  %v311 = vpack.c.b16 %v288, %v287
  %v312 = vpack.c.b16 %v290, %v289
  %v313 = vpack.c.b16 %v292, %v291
  %v314 = vpack.c.b16 %v294, %v293
  %v315 = vpack.c.b16 %v296, %v295
  %v316 = vpack.c.b16 %v298, %v297
  %v317 = vpack.c.b16 %v300, %v299
  %v318 = vpack.c.b16 %v302, %v301
  %335 = vmatprep.subr.bf16.mxu0 0
  %336 = vmatpush1.bf16.msra.mxu0 %v303
  %337 = vmatprep.subr.bf16.mxu0 0
  %338 = vmatpush1.bf16.msra.mxu0 %v304
  %339 = vmatprep.subr.bf16.mxu0 0
  %340 = vmatpush1.bf16.msra.mxu0 %v305
  %341 = vmatprep.subr.bf16.mxu0 0
  %342 = vmatpush1.bf16.msra.mxu0 %v306
  %343 = vmatprep.subr.bf16.mxu0 0
  %344 = vmatpush1.bf16.msra.mxu0 %v307
  %345 = vmatprep.subr.bf16.mxu0 0
  %346 = vmatpush1.bf16.msra.mxu0 %v308
  %347 = vmatprep.subr.bf16.mxu0 0
  %348 = vmatpush1.bf16.msra.mxu0 %v309
  %349 = vmatprep.subr.bf16.mxu0 0
  %350 = vmatpush1.bf16.msra.mxu0 %v310
  %351 = vmatprep.subr.bf16.mxu0 0
  %352 = vmatpush1.bf16.msra.mxu0 %v311
  %353 = vmatprep.subr.bf16.mxu0 0
  %354 = vmatpush1.bf16.msra.mxu0 %v312
  %355 = vmatprep.subr.bf16.mxu0 0
  %356 = vmatpush1.bf16.msra.mxu0 %v313
  %357 = vmatprep.subr.bf16.mxu0 0
  %358 = vmatpush1.bf16.msra.mxu0 %v314
  %359 = vmatprep.subr.bf16.mxu0 0
  %360 = vmatpush1.bf16.msra.mxu0 %v315
  %361 = vmatprep.subr.bf16.mxu0 0
  %362 = vmatpush1.bf16.msra.mxu0 %v316
  %363 = vmatprep.subr.bf16.mxu0 0
  %364 = vmatpush1.bf16.msra.mxu0 %v317
  %365 = vmatprep.subr.bf16.mxu0 0
  %366 = vmatpush1.bf16.msra.mxu0 %v318
  %367 = vmatprep.mubr.bf16.mxu0 %v176
  %368 = vmatmul.mubr.bf16.gmra.mrb[0].mxu0 %v175
  %v369 = vpop.f32.mrb[0].mxu0
  %v370 = vadd.f32 0.0, %v369
  %v371 = vpop.f32.mrb[0].mxu0
  %v372 = vpop.f32.mrb[0].mxu0
  %v373 = vadd.f32 0.0, %v372
  %v374 = vpop.f32.mrb[0].mxu0
  %375 = vmatprep.mubr.bf16.mxu0 %v178
  %376 = vmatmul.mubr.bf16.gmra.mrb[0].mxu0 %v177
  %v377 = vpop.f32.mrb[0].mxu0
  %v378 = vadd.f32 0.0, %v377
  %v379 = vpop.f32.mrb[0].mxu0
  %v380 = vpop.f32.mrb[0].mxu0
  %v381 = vadd.f32 0.0, %v380
  %v382 = vpop.f32.mrb[0].mxu0
  %383 = vmatprep.mubr.bf16.mxu0 %v180
  %384 = vmatmul.mubr.bf16.gmra.mrb[0].mxu0 %v179
  %v385 = vpop.f32.mrb[0].mxu0
  %v386 = vadd.f32 0.0, %v385
  %v387 = vpop.f32.mrb[0].mxu0
  %v388 = vpop.f32.mrb[0].mxu0
  %v389 = vadd.f32 0.0, %v388
  %v390 = vpop.f32.mrb[0].mxu0
  %391 = vmatprep.mubr.bf16.mxu0 %v182
  %392 = vmatmul.mubr.bf16.gmra.mrb[0].mxu0 %v181
  %v393 = vpop.f32.mrb[0].mxu0
  %v394 = vadd.f32 0.0, %v393
  %v395 = vpop.f32.mrb[0].mxu0
  %v396 = vpop.f32.mrb[0].mxu0
  %v397 = vadd.f32 0.0, %v396
  %v398 = vpop.f32.mrb[0].mxu0
  %399 = vmatprep.mubr.bf16.mxu0 %v184
  %400 = vmatmul.mubr.bf16.gmra.mrb[0].mxu0 %v183
  %v401 = vpop.f32.mrb[0].mxu0
  %v402 = vadd.f32 0.0, %v401
  %v403 = vpop.f32.mrb[0].mxu0
  %v404 = vpop.f32.mrb[0].mxu0
  %v405 = vadd.f32 0.0, %v404
  %v406 = vpop.f32.mrb[0].mxu0
  %407 = vmatprep.mubr.bf16.mxu0 %v186
  %408 = vmatmul.mubr.bf16.gmra.mrb[0].mxu0 %v185
  %v409 = vpop.f32.mrb[0].mxu0
  %v410 = vadd.f32 0.0, %v409
  %v411 = vpop.f32.mrb[0].mxu0
  %v412 = vpop.f32.mrb[0].mxu0
  %v413 = vadd.f32 0.0, %v412
  %v414 = vpop.f32.mrb[0].mxu0
  %415 = vmatprep.mubr.bf16.mxu0 %v188
  %416 = vmatmul.mubr.bf16.gmra.mrb[0].mxu0 %v187
  %v417 = vpop.f32.mrb[0].mxu0
  %v418 = vadd.f32 0.0, %v417
  %v419 = vpop.f32.mrb[0].mxu0
  %v420 = vpop.f32.mrb[0].mxu0
  %v421 = vadd.f32 0.0, %v420
  %v422 = vpop.f32.mrb[0].mxu0
  %423 = vmatprep.mubr.bf16.mxu0 %v190
  %424 = vmatmul.mubr.bf16.gmra.mrb[0].mxu0 %v189
  %v425 = vpop.f32.mrb[0].mxu0
  %v426 = vadd.f32 0.0, %v425
  %v427 = vpop.f32.mrb[0].mxu0
  %v428 = vpop.f32.mrb[0].mxu0
  %v429 = vadd.f32 0.0, %v428
  %v430 = vpop.f32.mrb[0].mxu0
  %431 = vmatprep.mubr.bf16.mxu0 %v192
  %432 = vmatmul.mubr.bf16.gmra.mrb[0].mxu0 %v191
  %v433 = vpop.f32.mrb[0].mxu0
  %v434 = vadd.f32 0.0, %v433
  %v435 = vpop.f32.mrb[0].mxu0
  %v436 = vpop.f32.mrb[0].mxu0
  %v437 = vadd.f32 0.0, %v436
  %v438 = vpop.f32.mrb[0].mxu0
  %439 = vmatprep.mubr.bf16.mxu0 %v194
  %440 = vmatmul.mubr.bf16.gmra.mrb[0].mxu0 %v193
  %v441 = vpop.f32.mrb[0].mxu0
  %v442 = vadd.f32 0.0, %v441
  %v443 = vpop.f32.mrb[0].mxu0
  %v444 = vpop.f32.mrb[0].mxu0
  %v445 = vadd.f32 0.0, %v444
  %v446 = vpop.f32.mrb[0].mxu0
  %447 = vmatprep.mubr.bf16.mxu0 %v196
  %448 = vmatmul.mubr.bf16.gmra.mrb[0].mxu0 %v195
  %v449 = vpop.f32.mrb[0].mxu0
  %v450 = vadd.f32 0.0, %v449
  %v451 = vpop.f32.mrb[0].mxu0
  %v452 = vpop.f32.mrb[0].mxu0
  %v453 = vadd.f32 0.0, %v452
  %v454 = vpop.f32.mrb[0].mxu0
  %455 = vmatprep.mubr.bf16.mxu0 %v198
  %456 = vmatmul.mubr.bf16.gmra.mrb[0].mxu0 %v197
  %v457 = vpop.f32.mrb[0].mxu0
  %v458 = vadd.f32 0.0, %v457
  %v459 = vpop.f32.mrb[0].mxu0
  %v460 = vpop.f32.mrb[0].mxu0
  %v461 = vadd.f32 0.0, %v460
  %v462 = vpop.f32.mrb[0].mxu0
  %463 = vmatprep.mubr.bf16.mxu0 %v200
  %464 = vmatmul.mubr.bf16.gmra.mrb[0].mxu0 %v199
  %v465 = vpop.f32.mrb[0].mxu0
  %v466 = vadd.f32 0.0, %v465
  %v467 = vpop.f32.mrb[0].mxu0
  %v468 = vpop.f32.mrb[0].mxu0
  %v469 = vadd.f32 0.0, %v468
  %v470 = vpop.f32.mrb[0].mxu0
  %471 = vmatprep.mubr.bf16.mxu0 %v202
  %472 = vmatmul.mubr.bf16.gmra.mrb[0].mxu0 %v201
  %v473 = vpop.f32.mrb[0].mxu0
  %v474 = vadd.f32 0.0, %v473
  %v475 = vpop.f32.mrb[0].mxu0
  %v476 = vpop.f32.mrb[0].mxu0
  %v477 = vadd.f32 0.0, %v476
  %v478 = vpop.f32.mrb[0].mxu0
  %479 = vmatprep.mubr.bf16.mxu0 %v204
  %480 = vmatmul.mubr.bf16.gmra.mrb[0].mxu0 %v203
  %v481 = vpop.f32.mrb[0].mxu0
  %v482 = vadd.f32 0.0, %v481
  %v483 = vpop.f32.mrb[0].mxu0
  %v484 = vpop.f32.mrb[0].mxu0
  %v485 = vadd.f32 0.0, %v484
  %v486 = vpop.f32.mrb[0].mxu0
  %487 = vmatprep.mubr.bf16.mxu0 %v206
  %488 = vmatmul.mubr.bf16.gmra.mrb[0].mxu0 %v205
  %v489 = vpop.f32.mrb[0].mxu0
  %v490 = vadd.f32 0.0, %v489
  %v491 = vpop.f32.mrb[0].mxu0
  %v492 = vpop.f32.mrb[0].mxu0
  %v493 = vadd.f32 0.0, %v492
  %v494 = vpop.f32.mrb[0].mxu0
  %495 = vdwg.mxu0
  %v496 = vmax.f32 %v370, %v402
  %v497 = vmax.f32 %v373, %v405
  %v498 = vmax.f32 %v378, %v410
  %v499 = vmax.f32 %v381, %v413
  %v500 = vmax.f32 %v386, %v418
  %v501 = vmax.f32 %v389, %v421
  %v502 = vmax.f32 %v394, %v426
  %v503 = vmax.f32 %v397, %v429
  %v504 = vmax.f32 %v434, %v466
  %v505 = vmax.f32 %v437, %v469
  %v506 = vmax.f32 %v442, %v474
  %v507 = vmax.f32 %v445, %v477
  %v508 = vmax.f32 %v450, %v482
  %v509 = vmax.f32 %v453, %v485
  %v510 = vmax.f32 %v458, %v490
  %v511 = vmax.f32 %v461, %v493
  %v512 = vmax.f32 %v496, %v504
  %v513 = vmax.f32 %v497, %v505
  %v514 = vmax.f32 %v498, %v506
  %v515 = vmax.f32 %v499, %v507
  %v516 = vmax.f32 %v500, %v508
  %v517 = vmax.f32 %v501, %v509
  %v518 = vmax.f32 %v502, %v510
  %v519 = vmax.f32 %v503, %v511
  %v520 = vld [vmem:[%s2] sm:$0x1]
  %v522 = vlaneseq
  %v523 = vshrl.u32 %v522, 7
  %v524 = vsub.s32 0, %v523
  %v525 = vrot.slane %v520, %v524
  %v527 = vadd.f32 %v512, %v525
  %v528 = vadd.f32 %v513, %v525
  %v529 = vadd.f32 %v514, %v525
  %v530 = vadd.f32 %v515, %v525
  %v531 = vadd.f32 %v516, %v525
  %v532 = vadd.f32 %v517, %v525
  %v533 = vadd.f32 %v518, %v525
  %v534 = vadd.f32 %v519, %v525
  %v535 = vmax.f32 %v527, 0.0
  %v536 = vmax.f32 %v528, 0.0
  %v537 = vmax.f32 %v529, 0.0
  %v538 = vmax.f32 %v530, 0.0
  %v539 = vmax.f32 %v531, 0.0
  %v540 = vmax.f32 %v532, 0.0
  %v541 = vmax.f32 %v533, 0.0
  %v542 = vmax.f32 %v534, 0.0
  %v543 = vpack.c.bf16 %v536, %v535
  %v544 = vpack.c.bf16 %v538, %v537
  %v545 = vpack.c.bf16 %v540, %v539
  %v546 = vpack.c.bf16 %v542, %v541
  %v551 = vunpack.c.l.b16 %v543
  %v552 = vunpack.c.h.b16 %v543
  %v553 = vunpack.c.l.b16 %v544
  %v554 = vunpack.c.h.b16 %v544
  %v555 = vunpack.c.l.b16 %v545
  %v556 = vunpack.c.h.b16 %v545
  %v557 = vunpack.c.l.b16 %v546
  %v558 = vunpack.c.h.b16 %v546
  %v559 = vpack.c.b16 %v551, %v551
  %v560 = vpack.c.b16 %v552, %v552
  %v561 = vpack.c.b16 %v553, %v553
  %v562 = vpack.c.b16 %v554, %v554
  %v563 = vpack.c.b16 %v555, %v555
  %v564 = vpack.c.b16 %v556, %v556
  %v565 = vpack.c.b16 %v557, %v557
  %v566 = vpack.c.b16 %v558, %v558
  %575 = vst [vmem:[%s3] sm:$0xf] %v559
  %576 = vst [vmem:[%s3 + $0x4] sm:$0xf] %v560
  %577 = vst [vmem:[%s3 + $0x8] sm:$0xf] %v561
  %578 = vst [vmem:[%s3 + $0xc] sm:$0xf] %v562
  %579 = vst [vmem:[%s3 + $0x10] sm:$0xf] %v563
  %580 = vst [vmem:[%s3 + $0x14] sm:$0xf] %v564
  %581 = vst [vmem:[%s3 + $0x18] sm:$0xf] %v565
  %582 = vst [vmem:[%s3 + $0x1c] sm:$0xf] %v566
  // Predicated region
  $region14: #{net_forward.4} parent=0 // pred_check
    _
  $region15: #{net_forward.4} parent=0 // pred_check_branch
    %584 = sbr.rel (0) target = $region17
  $region16: #{net_forward.4} parent=0 // pred_region
    _
  $region17: #{net_forward.4} parent=0 // pred_fallthru
    _
  // Predicated region
  $region18: #{net_forward.4} parent=0 // pred_check
    _
  $region19: #{net_forward.4} parent=0 // pred_check_branch
    %586 = sbr.rel (0) target = $region21
  $region20: #{net_forward.4} parent=0 // pred_region
    _
  $region21: #{net_forward.4} parent=0 // pred_fallthru
    _

// kernel: net_forward.5
$region0: #{net_forward.5}
  #allocation0 [shape = 'u32[]', space=smem, size = 0x4, offset = 0x4, fixed_abs, tag = 'smem constant byte address 0x4 - core index']
  #allocation1 [shape = 'u32[144,128]{1,0:T(1,128)}', space=vmem, size = 0x12000, scoped, tag = 'internal scratch']
  %s0 = inlined_call_operand.vmem [shape: bf16[32,512], index: 0, kind: input, shape index: {}]
  %s1 = inlined_call_operand.vmem [shape: bf16[512,128], index: 1, kind: input, shape index: {}]
  %s2 = inlined_call_operand.vmem [shape: f32[1,128], index: 2, kind: input, shape index: {}]
  %s3 = inlined_call_operand.vmem [shape: bf16[128,128], index: 3, kind: input, shape index: {}]
  %s4 = inlined_call_operand.vmem [shape: f32[1,128], index: 4, kind: input, shape index: {}]
  %s5 = inlined_call_operand.vmem [shape: bf16[128,128], index: 5, kind: input, shape index: {}]
  %s6 = inlined_call_operand.vmem [shape: f32[1,128], index: 6, kind: input, shape index: {}]
  %s7 = inlined_call_operand.vmem [shape: f32[32,128], index: 7, kind: output, shape index: {}]
  %s8 = sld [smem:[#allocation0]]
  $region38: #{net_forward.5} parent=0
    _
  %s10 = ssub.s32 1, %s8
  %s11 = scalar_select 0, %s10, %s8
  // Predicated region
  $region2: #{net_forward.5} parent=0 // pred_check
    _
  $region3: #{net_forward.5} parent=0 // pred_check_branch
    %13 = sbr.rel (0) target = $region5
  $region4: #{net_forward.5} parent=0 // pred_region
    _
  $region5: #{net_forward.5} parent=0 // pred_fallthru
    _
  // Predicated region
  $region6: #{net_forward.5} parent=0 // pred_check
    _
  $region7: #{net_forward.5} parent=0 // pred_check_branch
    %15 = sbr.rel (0) target = $region9
  $region8: #{net_forward.5} parent=0 // pred_region
    _
  $region9: #{net_forward.5} parent=0 // pred_fallthru
    _
  // Predicated region
  $region10: #{net_forward.5} parent=0 // pred_check
    _
  $region11: #{net_forward.5} parent=0 // pred_check_branch
    %17 = sbr.rel (0) target = $region13
  $region12: #{net_forward.5} parent=0 // pred_region
    _
  $region13: #{net_forward.5} parent=0 // pred_fallthru
    _
  // Predicated region
  $region14: #{net_forward.5} parent=0 // pred_check
    _
  $region15: #{net_forward.5} parent=0 // pred_check_branch
    %19 = sbr.rel (0) target = $region17
  $region16: #{net_forward.5} parent=0 // pred_region
    _
  $region17: #{net_forward.5} parent=0 // pred_fallthru
    _
  // Predicated region
  $region18: #{net_forward.5} parent=0 // pred_check
    _
  $region19: #{net_forward.5} parent=0 // pred_check_branch
    %21 = sbr.rel (0) target = $region21
  $region20: #{net_forward.5} parent=0 // pred_region
    _
  $region21: #{net_forward.5} parent=0 // pred_fallthru
    _
  // Predicated region
  $region22: #{net_forward.5} parent=0 // pred_check
    _
  $region23: #{net_forward.5} parent=0 // pred_check_branch
    %23 = sbr.rel (0) target = $region25
  $region24: #{net_forward.5} parent=0 // pred_region
    _
  $region25: #{net_forward.5} parent=0 // pred_fallthru
    _
  // Predicated region
  $region26: #{net_forward.5} parent=0 // pred_check
    _
  $region27: #{net_forward.5} parent=0 // pred_check_branch
    %25 = sbr.rel (0) target = $region29
  $region28: #{net_forward.5} parent=0 // pred_region
    _
  $region29: #{net_forward.5} parent=0 // pred_fallthru
    _
  %v27 = vld [vmem:[%s0] sm:$0xff]
  %v28 = vld [vmem:[%s0 + $0x8] sm:$0xff]
  %v29 = vld [vmem:[%s0 + $0x10] sm:$0xff]
  %v30 = vld [vmem:[%s0 + $0x18] sm:$0xff]
  %v31 = vld [vmem:[%s0 + $0x20] sm:$0xff]
  %v32 = vld [vmem:[%s0 + $0x28] sm:$0xff]
  %v33 = vld [vmem:[%s0 + $0x30] sm:$0xff]
  %v34 = vld [vmem:[%s0 + $0x38] sm:$0xff]
  %v35 = vld [vmem:[%s1] sm:$0xf]
  %v36 = vld [vmem:[%s1 + $0x4] sm:$0xf]
  %v37 = vld [vmem:[%s1 + $0x8] sm:$0xf]
  %v38 = vld [vmem:[%s1 + $0xc] sm:$0xf]
  %v39 = vld [vmem:[%s1 + $0x10] sm:$0xf]
  %v40 = vld [vmem:[%s1 + $0x14] sm:$0xf]
  %v41 = vld [vmem:[%s1 + $0x18] sm:$0xf]
  %v42 = vld [vmem:[%s1 + $0x1c] sm:$0xf]
  %v43 = vld [vmem:[%s1 + $0x20] sm:$0xf]
  %v44 = vld [vmem:[%s1 + $0x24] sm:$0xf]
  %v45 = vld [vmem:[%s1 + $0x28] sm:$0xf]
  %v46 = vld [vmem:[%s1 + $0x2c] sm:$0xf]
  %v47 = vld [vmem:[%s1 + $0x30] sm:$0xf]
  %v48 = vld [vmem:[%s1 + $0x34] sm:$0xf]
  %v49 = vld [vmem:[%s1 + $0x38] sm:$0xf]
  %v50 = vld [vmem:[%s1 + $0x3c] sm:$0xf]
  %v51 = vld [vmem:[%s1 + $0x40] sm:$0xf]
  %v52 = vld [vmem:[%s1 + $0x44] sm:$0xf]
  %v53 = vld [vmem:[%s1 + $0x48] sm:$0xf]
  %v54 = vld [vmem:[%s1 + $0x4c] sm:$0xf]
  %v55 = vld [vmem:[%s1 + $0x50] sm:$0xf]
  %v56 = vld [vmem:[%s1 + $0x54] sm:$0xf]
  %v57 = vld [vmem:[%s1 + $0x58] sm:$0xf]
  %v58 = vld [vmem:[%s1 + $0x5c] sm:$0xf]
  %v59 = vld [vmem:[%s1 + $0x60] sm:$0xf]
  %v60 = vld [vmem:[%s1 + $0x64] sm:$0xf]
  %v61 = vld [vmem:[%s1 + $0x68] sm:$0xf]
  %v62 = vld [vmem:[%s1 + $0x6c] sm:$0xf]
  %v63 = vld [vmem:[%s1 + $0x70] sm:$0xf]
  %v64 = vld [vmem:[%s1 + $0x74] sm:$0xf]
  %v65 = vld [vmem:[%s1 + $0x78] sm:$0xf]
  %v66 = vld [vmem:[%s1 + $0x7c] sm:$0xf]
  %v67 = vld [vmem:[%s1 + $0x80] sm:$0xf]
  %v68 = vld [vmem:[%s1 + $0x84] sm:$0xf]
  %v69 = vld [vmem:[%s1 + $0x88] sm:$0xf]
  %v70 = vld [vmem:[%s1 + $0x8c] sm:$0xf]
  %v71 = vld [vmem:[%s1 + $0x90] sm:$0xf]
  %v72 = vld [vmem:[%s1 + $0x94] sm:$0xf]
  %v73 = vld [vmem:[%s1 + $0x98] sm:$0xf]
  %v74 = vld [vmem:[%s1 + $0x9c] sm:$0xf]
  %v75 = vld [vmem:[%s1 + $0xa0] sm:$0xf]
  %v76 = vld [vmem:[%s1 + $0xa4] sm:$0xf]
  %v77 = vld [vmem:[%s1 + $0xa8] sm:$0xf]
  %v78 = vld [vmem:[%s1 + $0xac] sm:$0xf]
  %v79 = vld [vmem:[%s1 + $0xb0] sm:$0xf]
  %v80 = vld [vmem:[%s1 + $0xb4] sm:$0xf]
  %v81 = vld [vmem:[%s1 + $0xb8] sm:$0xf]
  %v82 = vld [vmem:[%s1 + $0xbc] sm:$0xf]
  %v83 = vld [vmem:[%s1 + $0xc0] sm:$0xf]
  %v84 = vld [vmem:[%s1 + $0xc4] sm:$0xf]
  %v85 = vld [vmem:[%s1 + $0xc8] sm:$0xf]
  %v86 = vld [vmem:[%s1 + $0xcc] sm:$0xf]
  %v87 = vld [vmem:[%s1 + $0xd0] sm:$0xf]
  %v88 = vld [vmem:[%s1 + $0xd4] sm:$0xf]
  %v89 = vld [vmem:[%s1 + $0xd8] sm:$0xf]
  %v90 = vld [vmem:[%s1 + $0xdc] sm:$0xf]
  %v91 = vld [vmem:[%s1 + $0xe0] sm:$0xf]
  %v92 = vld [vmem:[%s1 + $0xe4] sm:$0xf]
  %v93 = vld [vmem:[%s1 + $0xe8] sm:$0xf]
  %v94 = vld [vmem:[%s1 + $0xec] sm:$0xf]
  %v95 = vld [vmem:[%s1 + $0xf0] sm:$0xf]
  %v96 = vld [vmem:[%s1 + $0xf4] sm:$0xf]
  %v97 = vld [vmem:[%s1 + $0xf8] sm:$0xf]
  %v98 = vld [vmem:[%s1 + $0xfc] sm:$0xf]
  %v99 = vld [vmem:[%s2] sm:$0x1]
  %v101 = vlaneseq
  %v102 = vshrl.u32 %v101, 7
  %v103 = vsub.s32 0, %v102
  %v104 = vrot.slane %v99, %v103
  %v114 = vunpack.c.l.b16 %v27
  %v115 = vunpack.c.h.b16 %v27
  %v116 = vunpack.c.l.b16 %v28
  %v117 = vunpack.c.h.b16 %v28
  %v118 = vunpack.c.l.b16 %v29
  %v119 = vunpack.c.h.b16 %v29
  %v120 = vunpack.c.l.b16 %v30
  %v121 = vunpack.c.h.b16 %v30
  %v122 = vunpack.c.l.b16 %v31
  %v123 = vunpack.c.h.b16 %v31
  %v124 = vunpack.c.l.b16 %v32
  %v125 = vunpack.c.h.b16 %v32
  %v126 = vunpack.c.l.b16 %v33
  %v127 = vunpack.c.h.b16 %v33
  %v128 = vunpack.c.l.b16 %v34
  %v129 = vunpack.c.h.b16 %v34
  %v130 = vpack.c.b16 %v118, %v114
  %v131 = vpack.c.b16 %v119, %v115
  %v132 = vpack.c.b16 %v120, %v116
  %v133 = vpack.c.b16 %v121, %v117
  %v134 = vpack.c.b16 %v126, %v122
  %v135 = vpack.c.b16 %v127, %v123
  %v136 = vpack.c.b16 %v128, %v124
  %v137 = vpack.c.b16 %v129, %v125
  %v210 = vunpack.c.l.b16 %v35
  %v211 = vunpack.c.l.b16 %v36
  %v212 = vunpack.c.l.b16 %v37
  %v213 = vunpack.c.l.b16 %v38
  %v214 = vunpack.c.l.b16 %v39
  %v215 = vunpack.c.l.b16 %v40
  %v216 = vunpack.c.l.b16 %v41
  %v217 = vunpack.c.l.b16 %v42
  %v218 = vunpack.c.l.b16 %v43
  %v219 = vunpack.c.l.b16 %v44
  %v220 = vunpack.c.l.b16 %v45
  %v221 = vunpack.c.l.b16 %v46
  %v222 = vunpack.c.l.b16 %v47
  %v223 = vunpack.c.l.b16 %v48
  %v224 = vunpack.c.l.b16 %v49
  %v225 = vunpack.c.l.b16 %v50
  %v226 = vunpack.c.l.b16 %v51
  %v227 = vunpack.c.l.b16 %v52
  %v228 = vunpack.c.l.b16 %v53
  %v229 = vunpack.c.l.b16 %v54
  %v230 = vunpack.c.l.b16 %v55
  %v231 = vunpack.c.l.b16 %v56
  %v232 = vunpack.c.l.b16 %v57
  %v233 = vunpack.c.l.b16 %v58
  %v234 = vunpack.c.l.b16 %v59
  %v235 = vunpack.c.l.b16 %v60
  %v236 = vunpack.c.l.b16 %v61
  %v237 = vunpack.c.l.b16 %v62
  %v238 = vunpack.c.l.b16 %v63
  %v239 = vunpack.c.l.b16 %v64
  %v240 = vunpack.c.l.b16 %v65
  %v241 = vunpack.c.l.b16 %v66
  %v242 = vunpack.c.l.b16 %v67
  %v243 = vunpack.c.l.b16 %v68
  %v244 = vunpack.c.l.b16 %v69
  %v245 = vunpack.c.l.b16 %v70
  %v246 = vunpack.c.l.b16 %v71
  %v247 = vunpack.c.l.b16 %v72
  %v248 = vunpack.c.l.b16 %v73
  %v249 = vunpack.c.l.b16 %v74
  %v250 = vunpack.c.l.b16 %v75
  %v251 = vunpack.c.l.b16 %v76
  %v252 = vunpack.c.l.b16 %v77
  %v253 = vunpack.c.l.b16 %v78
  %v254 = vunpack.c.l.b16 %v79
  %v255 = vunpack.c.l.b16 %v80
  %v256 = vunpack.c.l.b16 %v81
  %v257 = vunpack.c.l.b16 %v82
  %v258 = vunpack.c.l.b16 %v83
  %v259 = vunpack.c.l.b16 %v84
  %v260 = vunpack.c.l.b16 %v85
  %v261 = vunpack.c.l.b16 %v86
  %v262 = vunpack.c.l.b16 %v87
  %v263 = vunpack.c.l.b16 %v88
  %v264 = vunpack.c.l.b16 %v89
  %v265 = vunpack.c.l.b16 %v90
  %v266 = vunpack.c.l.b16 %v91
  %v267 = vunpack.c.l.b16 %v92
  %v268 = vunpack.c.l.b16 %v93
  %v269 = vunpack.c.l.b16 %v94
  %v270 = vunpack.c.l.b16 %v95
  %v271 = vunpack.c.l.b16 %v96
  %v272 = vunpack.c.l.b16 %v97
  %v273 = vunpack.c.l.b16 %v98
  %v274 = vpack.c.b16 %v211, %v210
  %v275 = vpack.c.b16 %v213, %v212
  %v276 = vpack.c.b16 %v215, %v214
  %v277 = vpack.c.b16 %v217, %v216
  %v278 = vpack.c.b16 %v219, %v218
  %v279 = vpack.c.b16 %v221, %v220
  %v280 = vpack.c.b16 %v223, %v222
  %v281 = vpack.c.b16 %v225, %v224
  %v282 = vpack.c.b16 %v227, %v226
  %v283 = vpack.c.b16 %v229, %v228
  %v284 = vpack.c.b16 %v231, %v230
  %v285 = vpack.c.b16 %v233, %v232
  %v286 = vpack.c.b16 %v235, %v234
  %v287 = vpack.c.b16 %v237, %v236
  %v288 = vpack.c.b16 %v239, %v238
  %v289 = vpack.c.b16 %v241, %v240
  %v290 = vpack.c.b16 %v243, %v242
  %v291 = vpack.c.b16 %v245, %v244
  %v292 = vpack.c.b16 %v247, %v246
  %v293 = vpack.c.b16 %v249, %v248
  %v294 = vpack.c.b16 %v251, %v250
  %v295 = vpack.c.b16 %v253, %v252
  %v296 = vpack.c.b16 %v255, %v254
  %v297 = vpack.c.b16 %v257, %v256
  %v298 = vpack.c.b16 %v259, %v258
  %v299 = vpack.c.b16 %v261, %v260
  %v300 = vpack.c.b16 %v263, %v262
  %v301 = vpack.c.b16 %v265, %v264
  %v302 = vpack.c.b16 %v267, %v266
  %v303 = vpack.c.b16 %v269, %v268
  %v304 = vpack.c.b16 %v271, %v270
  %v305 = vpack.c.b16 %v273, %v272
  %338 = vmatprep.subr.bf16.mxu0 0
  %339 = vmatpush1.bf16.msra.mxu0 %v274
  %340 = vmatprep.subr.bf16.mxu0 0
  %341 = vmatpush1.bf16.msra.mxu0 %v275
  %342 = vmatprep.subr.bf16.mxu0 0
  %343 = vmatpush1.bf16.msra.mxu0 %v276
  %344 = vmatprep.subr.bf16.mxu0 0
  %345 = vmatpush1.bf16.msra.mxu0 %v277
  %346 = vmatprep.subr.bf16.mxu0 0
  %347 = vmatpush1.bf16.msra.mxu0 %v278
  %348 = vmatprep.subr.bf16.mxu0 0
  %349 = vmatpush1.bf16.msra.mxu0 %v279
  %350 = vmatprep.subr.bf16.mxu0 0
  %351 = vmatpush1.bf16.msra.mxu0 %v280
  %352 = vmatprep.subr.bf16.mxu0 0
  %353 = vmatpush1.bf16.msra.mxu0 %v281
  %354 = vmatprep.subr.bf16.mxu0 0
  %355 = vmatpush1.bf16.msra.mxu0 %v282
  %356 = vmatprep.subr.bf16.mxu0 0
  %357 = vmatpush1.bf16.msra.mxu0 %v283
  %358 = vmatprep.subr.bf16.mxu0 0
  %359 = vmatpush1.bf16.msra.mxu0 %v284
  %360 = vmatprep.subr.bf16.mxu0 0
  %361 = vmatpush1.bf16.msra.mxu0 %v285
  %362 = vmatprep.subr.bf16.mxu0 0
  %363 = vmatpush1.bf16.msra.mxu0 %v286
  %364 = vmatprep.subr.bf16.mxu0 0
  %365 = vmatpush1.bf16.msra.mxu0 %v287
  %366 = vmatprep.subr.bf16.mxu0 0
  %367 = vmatpush1.bf16.msra.mxu0 %v288
  %368 = vmatprep.subr.bf16.mxu0 0
  %369 = vmatpush1.bf16.msra.mxu0 %v289
  %370 = vmatprep.mubr.bf16.mxu0 %v131
  %371 = vmatmul.mubr.bf16.gmra.mrb[0].mxu0 %v130
  %v372 = vpop.f32.mrb[0].mxu0
  %v373 = vadd.f32 %v104, %v372
  %v374 = vpop.f32.mrb[0].mxu0
  %v375 = vpop.f32.mrb[0].mxu0
  %v376 = vadd.f32 %v104, %v375
  %v377 = vpop.f32.mrb[0].mxu0
  %378 = vmatprep.mubr.bf16.mxu0 %v135
  %379 = vmatmul.mubr.bf16.gmra.mrb[0].mxu0 %v134
  %v380 = vpop.f32.mrb[0].mxu0
  %v381 = vadd.f32 %v104, %v380
  %v382 = vpop.f32.mrb[0].mxu0
  %v383 = vpop.f32.mrb[0].mxu0
  %v384 = vadd.f32 %v104, %v383
  %v385 = vpop.f32.mrb[0].mxu0
  %386 = vdwg.mxu0
  %387 = vmatprep.subr.bf16.mxu0 0
  %388 = vmatpush1.bf16.msra.mxu0 %v290
  %389 = vmatprep.subr.bf16.mxu0 0
  %390 = vmatpush1.bf16.msra.mxu0 %v291
  %391 = vmatprep.subr.bf16.mxu0 0
  %392 = vmatpush1.bf16.msra.mxu0 %v292
  %393 = vmatprep.subr.bf16.mxu0 0
  %394 = vmatpush1.bf16.msra.mxu0 %v293
  %395 = vmatprep.subr.bf16.mxu0 0
  %396 = vmatpush1.bf16.msra.mxu0 %v294
  %397 = vmatprep.subr.bf16.mxu0 0
  %398 = vmatpush1.bf16.msra.mxu0 %v295
  %399 = vmatprep.subr.bf16.mxu0 0
  %400 = vmatpush1.bf16.msra.mxu0 %v296
  %401 = vmatprep.subr.bf16.mxu0 0
  %402 = vmatpush1.bf16.msra.mxu0 %v297
  %403 = vmatprep.subr.bf16.mxu0 0
  %404 = vmatpush1.bf16.msra.mxu0 %v298
  %405 = vmatprep.subr.bf16.mxu0 0
  %406 = vmatpush1.bf16.msra.mxu0 %v299
  %407 = vmatprep.subr.bf16.mxu0 0
  %408 = vmatpush1.bf16.msra.mxu0 %v300
  %409 = vmatprep.subr.bf16.mxu0 0
  %410 = vmatpush1.bf16.msra.mxu0 %v301
  %411 = vmatprep.subr.bf16.mxu0 0
  %412 = vmatpush1.bf16.msra.mxu0 %v302
  %413 = vmatprep.subr.bf16.mxu0 0
  %414 = vmatpush1.bf16.msra.mxu0 %v303
  %415 = vmatprep.subr.bf16.mxu0 0
  %416 = vmatpush1.bf16.msra.mxu0 %v304
  %417 = vmatprep.subr.bf16.mxu0 0
  %418 = vmatpush1.bf16.msra.mxu0 %v305
  %419 = vmatprep.mubr.bf16.mxu0 %v133
  %420 = vmatmul.mubr.bf16.gmra.mrb[0].mxu0 %v132
  %v421 = vpop.f32.mrb[0].mxu0
  %v422 = vadd.f32 %v373, %v421
  %v423 = vpop.f32.mrb[0].mxu0
  %v424 = vpop.f32.mrb[0].mxu0
  %v425 = vadd.f32 %v376, %v424
  %v426 = vpop.f32.mrb[0].mxu0
  %427 = vmatprep.mubr.bf16.mxu0 %v137
  %428 = vmatmul.mubr.bf16.gmra.mrb[0].mxu0 %v136
  %v429 = vpop.f32.mrb[0].mxu0
  %v430 = vadd.f32 %v381, %v429
  %v431 = vpop.f32.mrb[0].mxu0
  %v432 = vpop.f32.mrb[0].mxu0
  %v433 = vadd.f32 %v384, %v432
  %v434 = vpop.f32.mrb[0].mxu0
  %435 = vdwg.mxu0
  %v436 = vmax.f32 %v422, 0.0
  %v437 = vmax.f32 %v425, 0.0
  %v438 = vmax.f32 %v430, 0.0
  %v439 = vmax.f32 %v433, 0.0
  %v440 = vpack.c.bf16 %v437, %v436
  %v441 = vpack.c.bf16 %v439, %v438
  %v442 = vld [vmem:[%s3] sm:$0xf]
  %v443 = vld [vmem:[%s3 + $0x4] sm:$0xf]
  %v444 = vld [vmem:[%s3 + $0x8] sm:$0xf]
  %v445 = vld [vmem:[%s3 + $0xc] sm:$0xf]
  %v446 = vld [vmem:[%s3 + $0x10] sm:$0xf]
  %v447 = vld [vmem:[%s3 + $0x14] sm:$0xf]
  %v448 = vld [vmem:[%s3 + $0x18] sm:$0xf]
  %v449 = vld [vmem:[%s3 + $0x1c] sm:$0xf]
  %v450 = vld [vmem:[%s3 + $0x20] sm:$0xf]
  %v451 = vld [vmem:[%s3 + $0x24] sm:$0xf]
  %v452 = vld [vmem:[%s3 + $0x28] sm:$0xf]
  %v453 = vld [vmem:[%s3 + $0x2c] sm:$0xf]
  %v454 = vld [vmem:[%s3 + $0x30] sm:$0xf]
  %v455 = vld [vmem:[%s3 + $0x34] sm:$0xf]
  %v456 = vld [vmem:[%s3 + $0x38] sm:$0xf]
  %v457 = vld [vmem:[%s3 + $0x3c] sm:$0xf]
  %v458 = vld [vmem:[%s4] sm:$0x1]
  %v460 = vlaneseq
  %v461 = vshrl.u32 %v460, 7
  %v462 = vsub.s32 0, %v461
  %v463 = vrot.slane %v458, %v462
  %v481 = vunpack.c.l.b16 %v442
  %v482 = vunpack.c.l.b16 %v443
  %v483 = vunpack.c.l.b16 %v444
  %v484 = vunpack.c.l.b16 %v445
  %v485 = vunpack.c.l.b16 %v446
  %v486 = vunpack.c.l.b16 %v447
  %v487 = vunpack.c.l.b16 %v448
  %v488 = vunpack.c.l.b16 %v449
  %v489 = vunpack.c.l.b16 %v450
  %v490 = vunpack.c.l.b16 %v451
  %v491 = vunpack.c.l.b16 %v452
  %v492 = vunpack.c.l.b16 %v453
  %v493 = vunpack.c.l.b16 %v454
  %v494 = vunpack.c.l.b16 %v455
  %v495 = vunpack.c.l.b16 %v456
  %v496 = vunpack.c.l.b16 %v457
  %v497 = vpack.c.b16 %v482, %v481
  %v498 = vpack.c.b16 %v484, %v483
  %v499 = vpack.c.b16 %v486, %v485
  %v500 = vpack.c.b16 %v488, %v487
  %v501 = vpack.c.b16 %v490, %v489
  %v502 = vpack.c.b16 %v492, %v491
  %v503 = vpack.c.b16 %v494, %v493
  %v504 = vpack.c.b16 %v496, %v495
  %513 = vmatprep.subr.bf16.mxu0 0
  %514 = vmatpush1.bf16.msra.mxu0 %v497
  %515 = vmatprep.subr.bf16.mxu0 0
  %516 = vmatpush1.bf16.msra.mxu0 %v498
  %517 = vmatprep.subr.bf16.mxu0 0
  %518 = vmatpush1.bf16.msra.mxu0 %v499
  %519 = vmatprep.subr.bf16.mxu0 0
  %520 = vmatpush1.bf16.msra.mxu0 %v500
  %521 = vmatprep.subr.bf16.mxu0 0
  %522 = vmatpush1.bf16.msra.mxu0 %v501
  %523 = vmatprep.subr.bf16.mxu0 0
  %524 = vmatpush1.bf16.msra.mxu0 %v502
  %525 = vmatprep.subr.bf16.mxu0 0
  %526 = vmatpush1.bf16.msra.mxu0 %v503
  %527 = vmatprep.subr.bf16.mxu0 0
  %528 = vmatpush1.bf16.msra.mxu0 %v504
  %529 = vmatprep.subr.bf16.mxu0 0
  %530 = vmatpush1.bf16.msra.mxu0 0
  %531 = vmatprep.subr.bf16.mxu0 0
  %532 = vmatpush1.bf16.msra.mxu0 0
  %533 = vmatprep.subr.bf16.mxu0 0
  %534 = vmatpush1.bf16.msra.mxu0 0
  %535 = vmatprep.subr.bf16.mxu0 0
  %536 = vmatpush1.bf16.msra.mxu0 0
  %537 = vmatprep.subr.bf16.mxu0 0
  %538 = vmatpush1.bf16.msra.mxu0 0
  %539 = vmatprep.subr.bf16.mxu0 0
  %540 = vmatpush1.bf16.msra.mxu0 0
  %541 = vmatprep.subr.bf16.mxu0 0
  %542 = vmatpush1.bf16.msra.mxu0 0
  %543 = vmatprep.subr.bf16.mxu0 0
  %544 = vmatpush1.bf16.msra.mxu0 0
  %545 = vmatprep.mubr.bf16.mxu0 0
  %546 = vmatmul.mubr.bf16.gmra.mrb[0].mxu0 %v440
  %v547 = vpop.f32.mrb[0].mxu0
  %v548 = vadd.f32 %v463, %v547
  %v549 = vpop.f32.mrb[0].mxu0
  %v550 = vpop.f32.mrb[0].mxu0
  %v551 = vadd.f32 %v463, %v550
  %v552 = vpop.f32.mrb[0].mxu0
  %553 = vmatprep.mubr.bf16.mxu0 0
  %554 = vmatmul.mubr.bf16.gmra.mrb[0].mxu0 %v441
  %v555 = vpop.f32.mrb[0].mxu0
  %v556 = vadd.f32 %v463, %v555
  %v557 = vpop.f32.mrb[0].mxu0
  %v558 = vpop.f32.mrb[0].mxu0
  %v559 = vadd.f32 %v463, %v558
  %v560 = vpop.f32.mrb[0].mxu0
  %561 = vdwg.mxu0
  %v562 = vmax.f32 %v548, 0.0
  %v563 = vmax.f32 %v551, 0.0
  %v564 = vmax.f32 %v556, 0.0
  %v565 = vmax.f32 %v559, 0.0
  %v566 = vpack.c.bf16 %v563, %v562
  %v567 = vpack.c.bf16 %v565, %v564
  %v568 = vld [vmem:[%s5] sm:$0xf]
  %v569 = vld [vmem:[%s5 + $0x4] sm:$0xf]
  %v570 = vld [vmem:[%s5 + $0x8] sm:$0xf]
  %v571 = vld [vmem:[%s5 + $0xc] sm:$0xf]
  %v572 = vld [vmem:[%s5 + $0x10] sm:$0xf]
  %v573 = vld [vmem:[%s5 + $0x14] sm:$0xf]
  %v574 = vld [vmem:[%s5 + $0x18] sm:$0xf]
  %v575 = vld [vmem:[%s5 + $0x1c] sm:$0xf]
  %v576 = vld [vmem:[%s5 + $0x20] sm:$0xf]
  %v577 = vld [vmem:[%s5 + $0x24] sm:$0xf]
  %v578 = vld [vmem:[%s5 + $0x28] sm:$0xf]
  %v579 = vld [vmem:[%s5 + $0x2c] sm:$0xf]
  %v580 = vld [vmem:[%s5 + $0x30] sm:$0xf]
  %v581 = vld [vmem:[%s5 + $0x34] sm:$0xf]
  %v582 = vld [vmem:[%s5 + $0x38] sm:$0xf]
  %v583 = vld [vmem:[%s5 + $0x3c] sm:$0xf]
  %v584 = vld [vmem:[%s6] sm:$0x1]
  %v586 = vlaneseq
  %v587 = vshrl.u32 %v586, 7
  %v588 = vsub.s32 0, %v587
  %v589 = vrot.slane %v584, %v588
  %v607 = vunpack.c.l.b16 %v568
  %v608 = vunpack.c.l.b16 %v569
  %v609 = vunpack.c.l.b16 %v570
  %v610 = vunpack.c.l.b16 %v571
  %v611 = vunpack.c.l.b16 %v572
  %v612 = vunpack.c.l.b16 %v573
  %v613 = vunpack.c.l.b16 %v574
  %v614 = vunpack.c.l.b16 %v575
  %v615 = vunpack.c.l.b16 %v576
  %v616 = vunpack.c.l.b16 %v577
  %v617 = vunpack.c.l.b16 %v578
  %v618 = vunpack.c.l.b16 %v579
  %v619 = vunpack.c.l.b16 %v580
  %v620 = vunpack.c.l.b16 %v581
  %v621 = vunpack.c.l.b16 %v582
  %v622 = vunpack.c.l.b16 %v583
  %v623 = vpack.c.b16 %v608, %v607
  %v624 = vpack.c.b16 %v610, %v609
  %v625 = vpack.c.b16 %v612, %v611
  %v626 = vpack.c.b16 %v614, %v613
  %v627 = vpack.c.b16 %v616, %v615
  %v628 = vpack.c.b16 %v618, %v617
  %v629 = vpack.c.b16 %v620, %v619
  %v630 = vpack.c.b16 %v622, %v621
  %639 = vmatprep.subr.bf16.mxu0 0
  %640 = vmatpush1.bf16.msra.mxu0 %v623
  %641 = vmatprep.subr.bf16.mxu0 0
  %642 = vmatpush1.bf16.msra.mxu0 %v624
  %643 = vmatprep.subr.bf16.mxu0 0
  %644 = vmatpush1.bf16.msra.mxu0 %v625
  %645 = vmatprep.subr.bf16.mxu0 0
  %646 = vmatpush1.bf16.msra.mxu0 %v626
  %647 = vmatprep.subr.bf16.mxu0 0
  %648 = vmatpush1.bf16.msra.mxu0 %v627
  %649 = vmatprep.subr.bf16.mxu0 0
  %650 = vmatpush1.bf16.msra.mxu0 %v628
  %651 = vmatprep.subr.bf16.mxu0 0
  %652 = vmatpush1.bf16.msra.mxu0 %v629
  %653 = vmatprep.subr.bf16.mxu0 0
  %654 = vmatpush1.bf16.msra.mxu0 %v630
  %655 = vmatprep.subr.bf16.mxu0 0
  %656 = vmatpush1.bf16.msra.mxu0 0
  %657 = vmatprep.subr.bf16.mxu0 0
  %658 = vmatpush1.bf16.msra.mxu0 0
  %659 = vmatprep.subr.bf16.mxu0 0
  %660 = vmatpush1.bf16.msra.mxu0 0
  %661 = vmatprep.subr.bf16.mxu0 0
  %662 = vmatpush1.bf16.msra.mxu0 0
  %663 = vmatprep.subr.bf16.mxu0 0
  %664 = vmatpush1.bf16.msra.mxu0 0
  %665 = vmatprep.subr.bf16.mxu0 0
  %666 = vmatpush1.bf16.msra.mxu0 0
  %667 = vmatprep.subr.bf16.mxu0 0
  %668 = vmatpush1.bf16.msra.mxu0 0
  %669 = vmatprep.subr.bf16.mxu0 0
  %670 = vmatpush1.bf16.msra.mxu0 0
  %671 = vmatprep.mubr.bf16.mxu0 0
  %672 = vmatmul.mubr.bf16.gmra.mrb[0].mxu0 %v566
  %v673 = vpop.f32.mrb[0].mxu0
  %v674 = vadd.f32 %v589, %v673
  %v675 = vpop.f32.mrb[0].mxu0
  %v676 = vpop.f32.mrb[0].mxu0
  %v677 = vadd.f32 %v589, %v676
  %v678 = vpop.f32.mrb[0].mxu0
  %679 = vmatprep.mubr.bf16.mxu0 0
  %680 = vmatmul.mubr.bf16.gmra.mrb[0].mxu0 %v567
  %v681 = vpop.f32.mrb[0].mxu0
  %v682 = vadd.f32 %v589, %v681
  %v683 = vpop.f32.mrb[0].mxu0
  %v684 = vpop.f32.mrb[0].mxu0
  %v685 = vadd.f32 %v589, %v684
  %v686 = vpop.f32.mrb[0].mxu0
  %687 = vdwg.mxu0
  %688 = vst [vmem:[%s7] sm:$0xff] %v674
  %689 = vst [vmem:[%s7 + $0x8] sm:$0xff] %v677
  %690 = vst [vmem:[%s7 + $0x10] sm:$0xff] %v682
  %691 = vst [vmem:[%s7 + $0x18] sm:$0xff] %v685
  // Predicated region
  $region30: #{net_forward.5} parent=0 // pred_check
    _
  $region31: #{net_forward.5} parent=0 // pred_check_branch
    %693 = sbr.rel (0) target = $region33
  $region32: #{net_forward.5} parent=0 // pred_region
    _
  $region33: #{net_forward.5} parent=0 // pred_fallthru
    _
  // Predicated region
  $region34: #{net_forward.5} parent=0 // pred_check
    _
  $region35: #{net_forward.5} parent=0 // pred_check_branch
    %695 = sbr.rel (0) target = $region37
  $region36: #{net_forward.5} parent=0 // pred_region
    _
  $region37: #{net_forward.5} parent=0 // pred_fallthru
    _

</llo_original>
